<compile_context>
chip_gen: v5e
topology: v5e:2x2
jax: 0.10.0
libtpu: 0.0.40
codegen_flags: <defaults>
</compile_context>

<pallas_src>
import jax
import jax.numpy as jnp
from jax.experimental import pallas as pl
from jax.experimental.pallas import tpu as pltpu


_VMEM_LIMIT_BYTES = 48 * 1024 * 1024  # <= v7x 64 MiB physical VMEM; ample headroom on v5e/v6e.


def _swish(x):
    return x * jax.nn.sigmoid(x)


def _round_up(n, m):
    return int(pl.cdiv(int(n), int(m))) * int(m)


# --------------------------------------------------------------------------------------
# Pallas kernel: gated value + residual MLP (the only memory/MXU heavy part).
#   y   = g * wv                      (TM,1)*(1,Fp) broadcast, f32 on the VPU
#   out = y + W2.swish(W1.swish(y))   two bf16-operand MXU matmuls, f32 accumulation
# --------------------------------------------------------------------------------------
def _resblock_kernel(g_ref, wv_ref, w1_ref, b1_ref, w2_ref, b2_ref, o_ref):
    y = g_ref[...] * wv_ref[...]                                           # (TM, Fp) f32
    h = _swish(y)
    h = jnp.dot(h.astype(jnp.bfloat16), w1_ref[...],
                preferred_element_type=jnp.float32) + b1_ref[...]
    h = _swish(h)
    h = jnp.dot(h.astype(jnp.bfloat16), w2_ref[...],
                preferred_element_type=jnp.float32) + b2_ref[...]
    o_ref[...] = (y + h).astype(o_ref.dtype)


# --------------------------------------------------------------------------------------
# Wrapper
# --------------------------------------------------------------------------------------
def electronic_embedding(x, E, num_batch, batch_seg, params, eps=1e-8,
                         tile_m=512, out_dtype=jnp.float32):
    N, F = x.shape
    B = int(num_batch)
    if batch_seg is None:
        batch_seg = jnp.zeros((N,), jnp.int32)
    batch_seg = batch_seg.astype(jnp.int32)

    # ---- pass 1 (plain XLA; cheap streaming ops, per perf review item 10) ------------
    xf = x.astype(jnp.float32)
    wq = params["wq"].astype(jnp.float32)          # (F, F)
    wk = params["wk"].astype(jnp.float32)[0]       # (F,)
    bq = params["bq"].astype(jnp.float32)[0]       # (F,)

    # Fold Wq into wk (f32 fold, then used as-is):
    #   sum_f wk[f] * (x @ Wq + bq)[f] == x @ (Wq @ wk) + <bq, wk>
    wqk = wq @ wk                                  # (F,)
    bqk = jnp.dot(bq, wk)                          # scalar

    e_atom = jnp.abs(E.astype(jnp.float32))[batch_seg]                     # (N,)
    dot = e_atom * (xf @ wqk + bqk) * (1.0 / float(F) ** 0.5)              # (N,)
    a = jax.nn.softplus(dot)                                               # (N,)
    anorm = jnp.zeros((B,), jnp.float32).at[batch_seg].add(a)              # (B,)
    # exact f32 divide (no approximate reciprocal), folded with |E| into one gate scalar
    g = (a / (anorm[batch_seg] + eps)) * e_atom                            # (N,)

    # ---- pass 2 (Pallas kernel over atom-row tiles) ----------------------------------
    Fp = _round_up(F, 128)                         # lane-dense feature dim
    tm = _round_up(min(int(tile_m), _round_up(N, 8)), 8)
    Np = _round_up(N, tm)
    n_tiles = Np // tm

    g_p = jnp.pad(g, (0, Np - N))[:, None]                                 # (Np, 1) f32

    def pad_cols(a):
        return jnp.pad(a, ((0, 0), (0, Fp - a.shape[1])))

    def pad_sq(w):
        return jnp.pad(w, ((0, Fp - w.shape[0]), (0, Fp - w.shape[1])))

    wv = pad_cols(params["wv"]).astype(jnp.float32)                        # (1, Fp)
    w1 = pad_sq(params["w1"]).astype(jnp.bfloat16)                         # (Fp, Fp)
    b1 = pad_cols(params["b1"]).astype(jnp.float32)                        # (1, Fp)
    w2 = pad_sq(params["w2"]).astype(jnp.bfloat16)                         # (Fp, Fp)
    b2 = pad_cols(params["b2"]).astype(jnp.float32)                        # (1, Fp)

    def make_call(single_buffer_weights):
        wkwargs = {"pipeline_mode": pl.Buffered(1)} if single_buffer_weights else {}
        weight_spec = pl.BlockSpec((Fp, Fp), lambda i: (0, 0), **wkwargs)  # grid-invariant
        row_spec = pl.BlockSpec((1, Fp), lambda i: (0, 0))
        return pl.pallas_call(
            _resblock_kernel,
            grid=(n_tiles,),
            in_specs=[
                pl.BlockSpec((tm, 1), lambda i: (i, 0)),   # per-atom gate g
                row_spec,                                  # wv
                weight_spec,                               # W1 (bf16, pinned)
                row_spec,                                  # b1
                weight_spec,                               # W2 (bf16, pinned)
                row_spec,                                  # b2
            ],
            out_specs=pl.BlockSpec((tm, Fp), lambda i: (i, 0)),
            out_shape=jax.ShapeDtypeStruct((Np, Fp), out_dtype),
            compiler_params=pltpu.CompilerParams(
                dimension_semantics=("parallel",),         # megacore sharding on v7x
                vmem_limit_bytes=_VMEM_LIMIT_BYTES),
        )

    try:
        out_p = make_call(True)(g_p, wv, w1, b1, w2, b2)
    except Exception:
        # pl.Buffered(1) pinning is an optimization only; fall back to default
        # double-buffered pinned weights if this JAX/Mosaic build rejects it.
        out_p = make_call(False)(g_p, wv, w1, b1, w2, b2)

    return out_p[:N, :F]


# --------------------------------------------------------------------------------------
# Pure-JAX reference (mirrors the PyTorch forward, full f32)
# --------------------------------------------------------------------------------------
def reference_forward(x, E, num_batch, batch_seg, params, eps=1e-8):
    F_ = x.shape[1]
    q = x @ params["wq"] + params["bq"]
    e = jnp.abs(E.astype(jnp.float32))[:, None]           # (B, 1)
    k = (e * params["wk"])[batch_seg]                     # (N, F)
    v = (e * params["wv"])[batch_seg]                     # (N, F)
    dot = jnp.sum(k * q, axis=-1) / (F_ ** 0.5)           # (N,)
    a = jax.nn.softplus(dot)
    anorm = jnp.zeros(num_batch, jnp.float32).at[batch_seg].add(a)[batch_seg]
    y = (a / (anorm + eps))[:, None] * v
    h = _swish(y) @ params["w1"] + params["b1"]
    h = _swish(h) @ params["w2"] + params["b2"]
    return y + h


def init_params(key, num_features):
    ks = jax.random.split(key, 8)
    s = 1.0 / (num_features ** 0.5)
    return {
        "wq": jax.random.normal(ks[0], (num_features, num_features), jnp.float32) * s,
        "bq": jax.random.normal(ks[1], (1, num_features), jnp.float32) * 0.1,
        "wk": jax.random.normal(ks[2], (1, num_features), jnp.float32),   # Linear(1->F), no bias
        "wv": jax.random.normal(ks[3], (1, num_features), jnp.float32),   # Linear(1->F), no bias
        "w1": jax.random.normal(ks[4], (num_features, num_features), jnp.float32) * s,
        "b1": jax.random.normal(ks[5], (1, num_features), jnp.float32) * 0.1,
        "w2": jax.random.normal(ks[6], (num_features, num_features), jnp.float32) * s,
        "b2": jax.random.normal(ks[7], (1, num_features), jnp.float32) * 0.1,
    }


if __name__ == "__main__":
    key = jax.random.PRNGKey(0)
    k_x, k_E, k_p = jax.random.split(key, 3)

    N = 100           # number of atoms (exercises row padding: 100 -> 104 with tile 104)
    F = 128           # num_features (lane-dense feature dim)
    num_batch = 3     # number of molecules

    x = jax.random.normal(k_x, (N, F), jnp.float32)
    E = jax.random.normal(k_E, (num_batch,), jnp.float32) * 2.0   # e.g. total charge per molecule
    batch_seg = jnp.concatenate([
        jnp.zeros(40, jnp.int32),
        jnp.ones(35, jnp.int32),
        jnp.full((N - 75,), 2, jnp.int32),
    ])
    params = init_params(k_p, F)

    out = electronic_embedding(x, E, num_batch, batch_seg, params)
    out = jax.block_until_ready(out)

    ref = reference_forward(x, E, num_batch, batch_seg, params)
    assert out.shape == (N, F)
    max_err = float(jnp.max(jnp.abs(out - ref)))
    # The residual-MLP matmul operands are rounded to bf16 inside the kernel (f32 accumulation),
    # so compare against the f32 reference with a correspondingly loose tolerance.
    assert jnp.allclose(out, ref, atol=5e-2, rtol=5e-2), f"mismatch (max abs err {max_err})"

    print("KERNEL_OK")
</pallas_src>

<mosaic_0001>
module attributes {stable_mosaic.version = 11 : i64} {
  func.func @_resblock_kernel(%arg0: i32, %arg1: memref<104x1xf32, #tpu.memory_space<vmem>>, %arg2: memref<1x128xf32, #tpu.memory_space<vmem>>, %arg3: memref<128x128xbf16, #tpu.memory_space<vmem>>, %arg4: memref<1x128xf32, #tpu.memory_space<vmem>>, %arg5: memref<128x128xbf16, #tpu.memory_space<vmem>>, %arg6: memref<1x128xf32, #tpu.memory_space<vmem>>, %arg7: memref<104x128xf32, #tpu.memory_space<vmem>>) attributes {dimension_semantics = [#tpu.dimension_semantics<parallel>], iteration_bounds = array<i64: 1>, scalar_prefetch = 0 : i64, scratch_operands = 0 : i64, tpu.core_type = #tpu.core_type<tc>, window_params = [{transform_indices = @transform_0, window_bounds = array<i64: 104, 1>}, {pipeline_mode = #tpu.pipeline_mode<synchronous>, transform_indices = @transform_1, window_bounds = array<i64: 1, 128>}, {pipeline_mode = #tpu.pipeline_mode<synchronous>, transform_indices = @transform_2, window_bounds = array<i64: 128, 128>}, {pipeline_mode = #tpu.pipeline_mode<synchronous>, transform_indices = @transform_3, window_bounds = array<i64: 1, 128>}, {pipeline_mode = #tpu.pipeline_mode<synchronous>, transform_indices = @transform_4, window_bounds = array<i64: 128, 128>}, {pipeline_mode = #tpu.pipeline_mode<synchronous>, transform_indices = @transform_5, window_bounds = array<i64: 1, 128>}, {transform_indices = @transform_6, window_bounds = array<i64: 104, 128>}]} {
    %c0 = arith.constant 0 : index
    %c0_0 = arith.constant 0 : index
    %0 = vector.load %arg1[%c0, %c0_0] : memref<104x1xf32, #tpu.memory_space<vmem>>, vector<104x1xf32>
    %c0_1 = arith.constant 0 : index
    %c0_2 = arith.constant 0 : index
    %1 = vector.load %arg2[%c0_1, %c0_2] : memref<1x128xf32, #tpu.memory_space<vmem>>, vector<1x128xf32>
    %2 = vector.broadcast %0 : vector<104x1xf32> to vector<104x128xf32>
    %3 = vector.broadcast %1 : vector<1x128xf32> to vector<104x128xf32>
    %4 = arith.mulf %2, %3 : vector<104x128xf32>
    %5 = arith.negf %4 : vector<104x128xf32>
    %6 = math.exp %5 : vector<104x128xf32>
    %cst = arith.constant 1.000000e+00 : f32
    %7 = vector.broadcast %cst : f32 to vector<104x128xf32>
    %8 = arith.addf %7, %6 : vector<104x128xf32>
    %9 = arith.divf %7, %8 : vector<104x128xf32>
    %10 = arith.mulf %4, %9 : vector<104x128xf32>
    %11 = arith.truncf %10 : vector<104x128xf32> to vector<104x128xbf16>
    %c0_3 = arith.constant 0 : index
    %c0_4 = arith.constant 0 : index
    %12 = vector.load %arg3[%c0_3, %c0_4] : memref<128x128xbf16, #tpu.memory_space<vmem>>, vector<128x128xbf16>
    %cst_5 = arith.constant dense<0.000000e+00> : vector<104x128xf32>
    %13 = tpu.matmul %11, %12, %cst_5 {dimension_numbers = #tpu.dot_dimension_numbers<[1], [0], [0], [1], [0, 0, 1, 1], [], []>} : vector<104x128xbf16>, vector<128x128xbf16>, vector<104x128xf32> -> vector<104x128xf32>
    %c0_6 = arith.constant 0 : index
    %c0_7 = arith.constant 0 : index
    %14 = vector.load %arg4[%c0_6, %c0_7] : memref<1x128xf32, #tpu.memory_space<vmem>>, vector<1x128xf32>
    %15 = vector.broadcast %14 : vector<1x128xf32> to vector<104x128xf32>
    %16 = arith.addf %13, %15 : vector<104x128xf32>
    %17 = arith.negf %16 : vector<104x128xf32>
    %18 = math.exp %17 : vector<104x128xf32>
    %cst_8 = arith.constant 1.000000e+00 : f32
    %19 = vector.broadcast %cst_8 : f32 to vector<104x128xf32>
    %20 = arith.addf %19, %18 : vector<104x128xf32>
    %21 = arith.divf %19, %20 : vector<104x128xf32>
    %22 = arith.mulf %16, %21 : vector<104x128xf32>
    %23 = arith.truncf %22 : vector<104x128xf32> to vector<104x128xbf16>
    %c0_9 = arith.constant 0 : index
    %c0_10 = arith.constant 0 : index
    %24 = vector.load %arg5[%c0_9, %c0_10] : memref<128x128xbf16, #tpu.memory_space<vmem>>, vector<128x128xbf16>
    %cst_11 = arith.constant dense<0.000000e+00> : vector<104x128xf32>
    %25 = tpu.matmul %23, %24, %cst_11 {dimension_numbers = #tpu.dot_dimension_numbers<[1], [0], [0], [1], [0, 0, 1, 1], [], []>} : vector<104x128xbf16>, vector<128x128xbf16>, vector<104x128xf32> -> vector<104x128xf32>
    %c0_12 = arith.constant 0 : index
    %c0_13 = arith.constant 0 : index
    %26 = vector.load %arg6[%c0_12, %c0_13] : memref<1x128xf32, #tpu.memory_space<vmem>>, vector<1x128xf32>
    %27 = vector.broadcast %26 : vector<1x128xf32> to vector<104x128xf32>
    %28 = arith.addf %25, %27 : vector<104x128xf32>
    %29 = arith.addf %4, %28 : vector<104x128xf32>
    %c0_14 = arith.constant 0 : index
    %c0_15 = arith.constant 0 : index
    %30 = vector.load %arg7[%c0_14, %c0_15] : memref<104x128xf32, #tpu.memory_space<vmem>>, vector<104x128xf32>
    tpu.vector_store %arg7[%c0_14, %c0_15], %29 {strides = array<i32>} : memref<104x128xf32, #tpu.memory_space<vmem>>, vector<104x128xf32>,
    return
  }
  func.func @transform_0(%arg0: i32) -> (i32, i32) {
    %c0_i32 = arith.constant 0 : i32
    %c0_i32_0 = arith.constant 0 : i32
    return %arg0, %c0_i32 : i32, i32
  }
  func.func @transform_1(%arg0: i32) -> (i32, i32) {
    %c0_i32 = arith.constant 0 : i32
    %c0_i32_0 = arith.constant 0 : i32
    %c0_i32_1 = arith.constant 0 : i32
    return %c0_i32, %c0_i32_0 : i32, i32
  }
  func.func @transform_2(%arg0: i32) -> (i32, i32) {
    %c0_i32 = arith.constant 0 : i32
    %c0_i32_0 = arith.constant 0 : i32
    %c0_i32_1 = arith.constant 0 : i32
    return %c0_i32, %c0_i32_0 : i32, i32
  }
  func.func @transform_3(%arg0: i32) -> (i32, i32) {
    %c0_i32 = arith.constant 0 : i32
    %c0_i32_0 = arith.constant 0 : i32
    %c0_i32_1 = arith.constant 0 : i32
    return %c0_i32, %c0_i32_0 : i32, i32
  }
  func.func @transform_4(%arg0: i32) -> (i32, i32) {
    %c0_i32 = arith.constant 0 : i32
    %c0_i32_0 = arith.constant 0 : i32
    %c0_i32_1 = arith.constant 0 : i32
    return %c0_i32, %c0_i32_0 : i32, i32
  }
  func.func @transform_5(%arg0: i32) -> (i32, i32) {
    %c0_i32 = arith.constant 0 : i32
    %c0_i32_0 = arith.constant 0 : i32
    %c0_i32_1 = arith.constant 0 : i32
    return %c0_i32, %c0_i32_0 : i32, i32
  }
  func.func @transform_6(%arg0: i32) -> (i32, i32) {
    %c0_i32 = arith.constant 0 : i32
    %c0_i32_0 = arith.constant 0 : i32
    return %arg0, %c0_i32 : i32, i32
  }
}

module attributes {stable_mosaic.version = 11 : i64} {
  func.func @_resblock_kernel(%arg0: i32, %arg1: memref<104x1xf32, #tpu.memory_space<vmem>>, %arg2: memref<1x128xf32, #tpu.memory_space<vmem>>, %arg3: memref<128x128xbf16, #tpu.memory_space<vmem>>, %arg4: memref<1x128xf32, #tpu.memory_space<vmem>>, %arg5: memref<128x128xbf16, #tpu.memory_space<vmem>>, %arg6: memref<1x128xf32, #tpu.memory_space<vmem>>, %arg7: memref<104x128xf32, #tpu.memory_space<vmem>>) attributes {dimension_semantics = [#tpu.dimension_semantics<parallel>], iteration_bounds = array<i64: 1>, scalar_prefetch = 0 : i64, scratch_operands = 0 : i64, tpu.core_type = #tpu.core_type<tc>, window_params = [{transform_indices = @transform_0, window_bounds = array<i64: 104, 1>}, {pipeline_mode = #tpu.pipeline_mode<synchronous>, transform_indices = @transform_1, window_bounds = array<i64: 1, 128>}, {pipeline_mode = #tpu.pipeline_mode<synchronous>, transform_indices = @transform_2, window_bounds = array<i64: 128, 128>}, {pipeline_mode = #tpu.pipeline_mode<synchronous>, transform_indices = @transform_3, window_bounds = array<i64: 1, 128>}, {pipeline_mode = #tpu.pipeline_mode<synchronous>, transform_indices = @transform_4, window_bounds = array<i64: 128, 128>}, {pipeline_mode = #tpu.pipeline_mode<synchronous>, transform_indices = @transform_5, window_bounds = array<i64: 1, 128>}, {transform_indices = @transform_6, window_bounds = array<i64: 104, 128>}]} {
    %c0 = arith.constant 0 : index
    %c0_0 = arith.constant 0 : index
    %0 = vector.load %arg1[%c0, %c0_0] : memref<104x1xf32, #tpu.memory_space<vmem>>, vector<104x1xf32>
    %c0_1 = arith.constant 0 : index
    %c0_2 = arith.constant 0 : index
    %1 = vector.load %arg2[%c0_1, %c0_2] : memref<1x128xf32, #tpu.memory_space<vmem>>, vector<1x128xf32>
    %2 = vector.broadcast %0 : vector<104x1xf32> to vector<104x128xf32>
    %3 = vector.broadcast %1 : vector<1x128xf32> to vector<104x128xf32>
    %4 = arith.mulf %2, %3 : vector<104x128xf32>
    %5 = arith.negf %4 : vector<104x128xf32>
    %6 = math.exp %5 : vector<104x128xf32>
    %cst = arith.constant 1.000000e+00 : f32
    %7 = vector.broadcast %cst : f32 to vector<104x128xf32>
    %8 = arith.addf %7, %6 : vector<104x128xf32>
    %9 = arith.divf %7, %8 : vector<104x128xf32>
    %10 = arith.mulf %4, %9 : vector<104x128xf32>
    %11 = arith.truncf %10 : vector<104x128xf32> to vector<104x128xbf16>
    %c0_3 = arith.constant 0 : index
    %c0_4 = arith.constant 0 : index
    %12 = vector.load %arg3[%c0_3, %c0_4] : memref<128x128xbf16, #tpu.memory_space<vmem>>, vector<128x128xbf16>
    %cst_5 = arith.constant dense<0.000000e+00> : vector<104x128xf32>
    %13 = tpu.matmul %11, %12, %cst_5 {dimension_numbers = #tpu.dot_dimension_numbers<[1], [0], [0], [1], [0, 0, 1, 1], [], []>} : vector<104x128xbf16>, vector<128x128xbf16>, vector<104x128xf32> -> vector<104x128xf32>
    %c0_6 = arith.constant 0 : index
    %c0_7 = arith.constant 0 : index
    %14 = vector.load %arg4[%c0_6, %c0_7] : memref<1x128xf32, #tpu.memory_space<vmem>>, vector<1x128xf32>
    %15 = vector.broadcast %14 : vector<1x128xf32> to vector<104x128xf32>
    %16 = arith.addf %13, %15 : vector<104x128xf32>
    %17 = arith.negf %16 : vector<104x128xf32>
    %18 = math.exp %17 : vector<104x128xf32>
    %cst_8 = arith.constant 1.000000e+00 : f32
    %19 = vector.broadcast %cst_8 : f32 to vector<104x128xf32>
    %20 = arith.addf %19, %18 : vector<104x128xf32>
    %21 = arith.divf %19, %20 : vector<104x128xf32>
    %22 = arith.mulf %16, %21 : vector<104x128xf32>
    %23 = arith.truncf %22 : vector<104x128xf32> to vector<104x128xbf16>
    %c0_9 = arith.constant 0 : index
    %c0_10 = arith.constant 0 : index
    %24 = vector.load %arg5[%c0_9, %c0_10] : memref<128x128xbf16, #tpu.memory_space<vmem>>, vector<128x128xbf16>
    %cst_11 = arith.constant dense<0.000000e+00> : vector<104x128xf32>
    %25 = tpu.matmul %23, %24, %cst_11 {dimension_numbers = #tpu.dot_dimension_numbers<[1], [0], [0], [1], [0, 0, 1, 1], [], []>} : vector<104x128xbf16>, vector<128x128xbf16>, vector<104x128xf32> -> vector<104x128xf32>
    %c0_12 = arith.constant 0 : index
    %c0_13 = arith.constant 0 : index
    %26 = vector.load %arg6[%c0_12, %c0_13] : memref<1x128xf32, #tpu.memory_space<vmem>>, vector<1x128xf32>
    %27 = vector.broadcast %26 : vector<1x128xf32> to vector<104x128xf32>
    %28 = arith.addf %25, %27 : vector<104x128xf32>
    %29 = arith.addf %4, %28 : vector<104x128xf32>
    %c0_14 = arith.constant 0 : index
    %c0_15 = arith.constant 0 : index
    %30 = vector.load %arg7[%c0_14, %c0_15] : memref<104x128xf32, #tpu.memory_space<vmem>>, vector<104x128xf32>
    tpu.vector_store %arg7[%c0_14, %c0_15], %29 {strides = array<i32>} : memref<104x128xf32, #tpu.memory_space<vmem>>, vector<104x128xf32>,
    return
  }
  func.func @transform_0(%arg0: i32) -> (i32, i32) {
    %c0_i32 = arith.constant 0 : i32
    %c0_i32_0 = arith.constant 0 : i32
    return %arg0, %c0_i32 : i32, i32
  }
  func.func @transform_1(%arg0: i32) -> (i32, i32) {
    %c0_i32 = arith.constant 0 : i32
    %c0_i32_0 = arith.constant 0 : i32
    %c0_i32_1 = arith.constant 0 : i32
    return %c0_i32, %c0_i32_0 : i32, i32
  }
  func.func @transform_2(%arg0: i32) -> (i32, i32) {
    %c0_i32 = arith.constant 0 : i32
    %c0_i32_0 = arith.constant 0 : i32
    %c0_i32_1 = arith.constant 0 : i32
    return %c0_i32, %c0_i32_0 : i32, i32
  }
  func.func @transform_3(%arg0: i32) -> (i32, i32) {
    %c0_i32 = arith.constant 0 : i32
    %c0_i32_0 = arith.constant 0 : i32
    %c0_i32_1 = arith.constant 0 : i32
    return %c0_i32, %c0_i32_0 : i32, i32
  }
  func.func @transform_4(%arg0: i32) -> (i32, i32) {
    %c0_i32 = arith.constant 0 : i32
    %c0_i32_0 = arith.constant 0 : i32
    %c0_i32_1 = arith.constant 0 : i32
    return %c0_i32, %c0_i32_0 : i32, i32
  }
  func.func @transform_5(%arg0: i32) -> (i32, i32) {
    %c0_i32 = arith.constant 0 : i32
    %c0_i32_0 = arith.constant 0 : i32
    %c0_i32_1 = arith.constant 0 : i32
    return %c0_i32, %c0_i32_0 : i32, i32
  }
  func.func @transform_6(%arg0: i32) -> (i32, i32) {
    %c0_i32 = arith.constant 0 : i32
    %c0_i32_0 = arith.constant 0 : i32
    return %arg0, %c0_i32 : i32, i32
  }
}

</mosaic_0001>

<llo_original>
// kernel: tpu_custom_call.1
$region0: #{tpu_custom_call.1}
  #allocation0 [shape = 'u32[]', space=smem, size = 0x4, offset = 0x4, fixed_abs, tag = 'smem constant byte address 0x4 - core index']
  #allocation1 [shape = 'u32[72,128]{1,0:T(1,128)}', space=vmem, size = 0x9000, scoped, tag = 'internal scratch']
  %s0 = inlined_call_operand.vmem [shape: f32[104,1], index: 0, kind: input, shape index: {}]
  %s1 = inlined_call_operand.vmem [shape: f32[1,128], index: 1, kind: input, shape index: {}]
  %s2 = inlined_call_operand.vmem [shape: bf16[128,128], index: 2, kind: input, shape index: {}]
  %s3 = inlined_call_operand.vmem [shape: f32[1,128], index: 3, kind: input, shape index: {}]
  %s4 = inlined_call_operand.hbm [shape: bf16[128,128], index: 4, kind: input, shape index: {}]
  %s5 = inlined_call_operand.vmem [shape: f32[1,128], index: 5, kind: input, shape index: {}]
  %s6 = inlined_call_operand.hbm [shape: f32[104,128], index: 6, kind: output, shape index: {}]
  %s7 = sld [smem:[#allocation0]]
  $region38: #{tpu_custom_call.1} parent=0
    _
  %s9 = ssub.s32 1, %s7
  %s10 = scalar_select 0, %s9, %s7
  $region1: #{tpu_custom_call.1} parent=0
    #allocation2 [shape = 'u8[32768]{0}', space=vmem, size = 0x8000, scoped, tag = 'input window, operand 4, single buffered']
    #allocation3 [shape = 's32[1]{0}', space=sflag, size = 0x4, scoped, tag = 'scoped memory for tpu_custom_call.1']
    #allocation4 [shape = 's32[1]{0}', space=sflag, size = 0x4, scoped, tag = 'scoped memory for tpu_custom_call.1']
    #allocation5 [shape = 'u8[53248]{0}', space=vmem, size = 0xd000, scoped, tag = 'output window, operand 0, single buffered']
    %11 = vsyncpa [#allocation3], 0
    %12 = vsyncpa [#allocation4], 0
    // Predicated region
    $region2: #{tpu_custom_call.1} parent=1 // pred_check
      _
    $region3: #{tpu_custom_call.1} parent=1 // pred_check_branch
      %14 = sbr.rel (0) target = $region5
    $region4: #{tpu_custom_call.1} parent=1 // pred_region
      _
    $region5: #{tpu_custom_call.1} parent=1 // pred_fallthru
      _
    // Predicated region
    $region6: #{tpu_custom_call.1} parent=1 // pred_check
      _
    $region7: #{tpu_custom_call.1} parent=1 // pred_check_branch
      %16 = sbr.rel (0) target = $region9
    $region8: #{tpu_custom_call.1} parent=1 // pred_region
      _
    $region9: #{tpu_custom_call.1} parent=1 // pred_fallthru
      _
    // Predicated region
    $region10: #{tpu_custom_call.1} parent=1 // pred_check
      _
    $region11: #{tpu_custom_call.1} parent=1 // pred_check_branch
      %18 = sbr.rel (0) target = $region13
    $region12: #{tpu_custom_call.1} parent=1 // pred_region
      _
    $region13: #{tpu_custom_call.1} parent=1 // pred_fallthru
      _
    // Predicated region
    $region14: #{tpu_custom_call.1} parent=1 // pred_check
      _
    $region15: #{tpu_custom_call.1} parent=1 // pred_check_branch
      %20 = sbr.rel (0) target = $region17
    $region16: #{tpu_custom_call.1} parent=1 // pred_region
      _
    $region17: #{tpu_custom_call.1} parent=1 // pred_fallthru
      _
    // Predicated region
    $region18: #{tpu_custom_call.1} parent=1 // pred_check
      _
    $region19: #{tpu_custom_call.1} parent=1 // pred_check_branch
      %22 = sbr.rel (0) target = $region21
    $region20: #{tpu_custom_call.1} parent=1 // pred_region
      %24 = vsyncadd [#allocation3], 0
      %s25 = sshll.u32 %s4, 4
      %s26 = int_to_ptr.hbm [resolvable:$true] %s25
      %s27 = sshll.u32 [#allocation2], 4
      %s28 = int_to_ptr.vmem [resolvable:$true] %s27
      %33 = dma.hbm_to_vmem [thread:$0]  %s26, 1024, %s28, [#allocation3], 64, 64, 4
    $region21: #{tpu_custom_call.1} parent=1 // pred_fallthru
      _
    // Predicated region
    $region22: #{tpu_custom_call.1} parent=1 // pred_check
      _
    $region23: #{tpu_custom_call.1} parent=1 // pred_check_branch
      %35 = sbr.rel (0) target = $region25
    $region24: #{tpu_custom_call.1} parent=1 // pred_region
      _
    $region25: #{tpu_custom_call.1} parent=1 // pred_fallthru
      _
    // Predicated region
    $region26: #{tpu_custom_call.1} parent=1 // pred_check
      _
    $region27: #{tpu_custom_call.1} parent=1 // pred_check_branch
      %37 = sbr.rel (0) target = $region29
    $region28: #{tpu_custom_call.1} parent=1 // pred_region
      %39 = dma.done [#allocation3], 1024
    $region29: #{tpu_custom_call.1} parent=1 // pred_fallthru
      _
    %v40 = vld [vmem:[%s0] sm:$0xff]
    %v41 = vld [vmem:[%s0 + $0x8] sm:$0xff]
    %v42 = vld [vmem:[%s0 + $0x10] sm:$0xff]
    %v43 = vld [vmem:[%s0 + $0x18] sm:$0xff]
    %v44 = vld [vmem:[%s0 + $0x20] sm:$0xff]
    %v45 = vld [vmem:[%s0 + $0x28] sm:$0xff]
    %v46 = vld [vmem:[%s0 + $0x30] sm:$0xff]
    %v47 = vld [vmem:[%s0 + $0x38] sm:$0xff]
    %v48 = vld [vmem:[%s0 + $0x40] sm:$0xff]
    %v49 = vld [vmem:[%s0 + $0x48] sm:$0xff]
    %v50 = vld [vmem:[%s0 + $0x50] sm:$0xff]
    %v51 = vld [vmem:[%s0 + $0x58] sm:$0xff]
    %v52 = vld [vmem:[%s0 + $0x60] sm:$0xff]
    %v53 = vld [vmem:[%s1] sm:$0x1]
    %55 = vset.pattern.permute.xlu0 0
    %56 = vperm.xlu0 %55, %v40
    %v57 = vpop.permute.xlu0 %56
    %60 = vset.pattern.permute.xlu0 0
    %61 = vperm.xlu0 %60, %v41
    %v62 = vpop.permute.xlu0 %61
    %65 = vset.pattern.permute.xlu0 0
    %66 = vperm.xlu0 %65, %v42
    %v67 = vpop.permute.xlu0 %66
    %70 = vset.pattern.permute.xlu0 0
    %71 = vperm.xlu0 %70, %v43
    %v72 = vpop.permute.xlu0 %71
    %75 = vset.pattern.permute.xlu0 0
    %76 = vperm.xlu0 %75, %v44
    %v77 = vpop.permute.xlu0 %76
    %80 = vset.pattern.permute.xlu0 0
    %81 = vperm.xlu0 %80, %v45
    %v82 = vpop.permute.xlu0 %81
    %85 = vset.pattern.permute.xlu0 0
    %86 = vperm.xlu0 %85, %v46
    %v87 = vpop.permute.xlu0 %86
    %90 = vset.pattern.permute.xlu0 0
    %91 = vperm.xlu0 %90, %v47
    %v92 = vpop.permute.xlu0 %91
    %95 = vset.pattern.permute.xlu0 0
    %96 = vperm.xlu0 %95, %v48
    %v97 = vpop.permute.xlu0 %96
    %100 = vset.pattern.permute.xlu0 0
    %101 = vperm.xlu0 %100, %v49
    %v102 = vpop.permute.xlu0 %101
    %105 = vset.pattern.permute.xlu0 0
    %106 = vperm.xlu0 %105, %v50
    %v107 = vpop.permute.xlu0 %106
    %110 = vset.pattern.permute.xlu0 0
    %111 = vperm.xlu0 %110, %v51
    %v112 = vpop.permute.xlu0 %111
    %115 = vset.pattern.permute.xlu0 0
    %116 = vperm.xlu0 %115, %v52
    %v117 = vpop.permute.xlu0 %116
    %v120 = vperm.slane %v53, 0
    %v122 = vmul.f32 %v57, %v120
    %v123 = vmul.f32 %v62, %v120
    %v124 = vmul.f32 %v67, %v120
    %v125 = vmul.f32 %v72, %v120
    %v126 = vmul.f32 %v77, %v120
    %v127 = vmul.f32 %v82, %v120
    %v128 = vmul.f32 %v87, %v120
    %v129 = vmul.f32 %v92, %v120
    %v130 = vmul.f32 %v97, %v120
    %v131 = vmul.f32 %v102, %v120
    %v132 = vmul.f32 %v107, %v120
    %v133 = vmul.f32 %v112, %v120
    %v134 = vmul.f32 %v117, %v120
    %v135 = vxor.u32 %v122, 2147483648
    %v136 = vxor.u32 %v123, 2147483648
    %v137 = vxor.u32 %v124, 2147483648
    %v138 = vxor.u32 %v125, 2147483648
    %v139 = vxor.u32 %v126, 2147483648
    %v140 = vxor.u32 %v127, 2147483648
    %v141 = vxor.u32 %v128, 2147483648
    %v142 = vxor.u32 %v129, 2147483648
    %v143 = vxor.u32 %v130, 2147483648
    %v144 = vxor.u32 %v131, 2147483648
    %v145 = vxor.u32 %v132, 2147483648
    %v146 = vxor.u32 %v133, 2147483648
    %v147 = vxor.u32 %v134, 2147483648
    %v148 = vmul.f32 %v135, 1.442695
    %v149 = vpow.pop %v148
    %v150 = vmul.f32 %v136, 1.442695
    %v151 = vpow.pop %v150
    %v152 = vmul.f32 %v137, 1.442695
    %v153 = vpow.pop %v152
    %v154 = vmul.f32 %v138, 1.442695
    %v155 = vpow.pop %v154
    %v156 = vmul.f32 %v139, 1.442695
    %v157 = vpow.pop %v156
    %v158 = vmul.f32 %v140, 1.442695
    %v159 = vpow.pop %v158
    %v160 = vmul.f32 %v141, 1.442695
    %v161 = vpow.pop %v160
    %v162 = vmul.f32 %v142, 1.442695
    %v163 = vpow.pop %v162
    %v164 = vmul.f32 %v143, 1.442695
    %v165 = vpow.pop %v164
    %v166 = vmul.f32 %v144, 1.442695
    %v167 = vpow.pop %v166
    %v168 = vmul.f32 %v145, 1.442695
    %v169 = vpow.pop %v168
    %v170 = vmul.f32 %v146, 1.442695
    %v171 = vpow.pop %v170
    %v172 = vmul.f32 %v147, 1.442695
    %v173 = vpow.pop %v172
    %v174 = vadd.f32 %v149, 1.0
    %v175 = vadd.f32 %v151, 1.0
    %v176 = vadd.f32 %v153, 1.0
    %v177 = vadd.f32 %v155, 1.0
    %v178 = vadd.f32 %v157, 1.0
    %v179 = vadd.f32 %v159, 1.0
    %v180 = vadd.f32 %v161, 1.0
    %v181 = vadd.f32 %v163, 1.0
    %v182 = vadd.f32 %v165, 1.0
    %v183 = vadd.f32 %v167, 1.0
    %v184 = vadd.f32 %v169, 1.0
    %v185 = vadd.f32 %v171, 1.0
    %v186 = vadd.f32 %v173, 1.0
    %v187 = vrcp.pop %v174
    %v188 = vmul.f32 %v174, %v187
    %v189 = vsub.f32 1.0, %v188
    %v190 = vmul.f32 %v187, %v189
    %v191 = vadd.f32 %v187, %v190
    %vm192 = vweird.f32 %v174
    %vm193 = vweird.f32 %v187
    %vm194 = vmor %vm192, %vm193
    %v195 = vsel %vm194, %v187, %v191
    %v196 = vand.u32 2147483647, %v174
    %vm197 = vcmp.eq.f32.partialorder %v196, 8.507059e+37
    %v198 = vand.u32 %v174, 2147483648
    %v199 = vor.u32 1.1754944e-38, %v198
    %v200 = vsel %vm197, %v199, %v195
    %v201 = vmul.f32 1.0, %v200
    %v202 = vrcp.pop %v175
    %v203 = vmul.f32 %v175, %v202
    %v204 = vsub.f32 1.0, %v203
    %v205 = vmul.f32 %v202, %v204
    %v206 = vadd.f32 %v202, %v205
    %vm207 = vweird.f32 %v175
    %vm208 = vweird.f32 %v202
    %vm209 = vmor %vm207, %vm208
    %v210 = vsel %vm209, %v202, %v206
    %v211 = vand.u32 2147483647, %v175
    %vm212 = vcmp.eq.f32.partialorder %v211, 8.507059e+37
    %v213 = vand.u32 %v175, 2147483648
    %v214 = vor.u32 1.1754944e-38, %v213
    %v215 = vsel %vm212, %v214, %v210
    %v216 = vmul.f32 1.0, %v215
    %v217 = vrcp.pop %v176
    %v218 = vmul.f32 %v176, %v217
    %v219 = vsub.f32 1.0, %v218
    %v220 = vmul.f32 %v217, %v219
    %v221 = vadd.f32 %v217, %v220
    %vm222 = vweird.f32 %v176
    %vm223 = vweird.f32 %v217
    %vm224 = vmor %vm222, %vm223
    %v225 = vsel %vm224, %v217, %v221
    %v226 = vand.u32 2147483647, %v176
    %vm227 = vcmp.eq.f32.partialorder %v226, 8.507059e+37
    %v228 = vand.u32 %v176, 2147483648
    %v229 = vor.u32 1.1754944e-38, %v228
    %v230 = vsel %vm227, %v229, %v225
    %v231 = vmul.f32 1.0, %v230
    %v232 = vrcp.pop %v177
    %v233 = vmul.f32 %v177, %v232
    %v234 = vsub.f32 1.0, %v233
    %v235 = vmul.f32 %v232, %v234
    %v236 = vadd.f32 %v232, %v235
    %vm237 = vweird.f32 %v177
    %vm238 = vweird.f32 %v232
    %vm239 = vmor %vm237, %vm238
    %v240 = vsel %vm239, %v232, %v236
    %v241 = vand.u32 2147483647, %v177
    %vm242 = vcmp.eq.f32.partialorder %v241, 8.507059e+37
    %v243 = vand.u32 %v177, 2147483648
    %v244 = vor.u32 1.1754944e-38, %v243
    %v245 = vsel %vm242, %v244, %v240
    %v246 = vmul.f32 1.0, %v245
    %v247 = vrcp.pop %v178
    %v248 = vmul.f32 %v178, %v247
    %v249 = vsub.f32 1.0, %v248
    %v250 = vmul.f32 %v247, %v249
    %v251 = vadd.f32 %v247, %v250
    %vm252 = vweird.f32 %v178
    %vm253 = vweird.f32 %v247
    %vm254 = vmor %vm252, %vm253
    %v255 = vsel %vm254, %v247, %v251
    %v256 = vand.u32 2147483647, %v178
    %vm257 = vcmp.eq.f32.partialorder %v256, 8.507059e+37
    %v258 = vand.u32 %v178, 2147483648
    %v259 = vor.u32 1.1754944e-38, %v258
    %v260 = vsel %vm257, %v259, %v255
    %v261 = vmul.f32 1.0, %v260
    %v262 = vrcp.pop %v179
    %v263 = vmul.f32 %v179, %v262
    %v264 = vsub.f32 1.0, %v263
    %v265 = vmul.f32 %v262, %v264
    %v266 = vadd.f32 %v262, %v265
    %vm267 = vweird.f32 %v179
    %vm268 = vweird.f32 %v262
    %vm269 = vmor %vm267, %vm268
    %v270 = vsel %vm269, %v262, %v266
    %v271 = vand.u32 2147483647, %v179
    %vm272 = vcmp.eq.f32.partialorder %v271, 8.507059e+37
    %v273 = vand.u32 %v179, 2147483648
    %v274 = vor.u32 1.1754944e-38, %v273
    %v275 = vsel %vm272, %v274, %v270
    %v276 = vmul.f32 1.0, %v275
    %v277 = vrcp.pop %v180
    %v278 = vmul.f32 %v180, %v277
    %v279 = vsub.f32 1.0, %v278
    %v280 = vmul.f32 %v277, %v279
    %v281 = vadd.f32 %v277, %v280
    %vm282 = vweird.f32 %v180
    %vm283 = vweird.f32 %v277
    %vm284 = vmor %vm282, %vm283
    %v285 = vsel %vm284, %v277, %v281
    %v286 = vand.u32 2147483647, %v180
    %vm287 = vcmp.eq.f32.partialorder %v286, 8.507059e+37
    %v288 = vand.u32 %v180, 2147483648
    %v289 = vor.u32 1.1754944e-38, %v288
    %v290 = vsel %vm287, %v289, %v285
    %v291 = vmul.f32 1.0, %v290
    %v292 = vrcp.pop %v181
    %v293 = vmul.f32 %v181, %v292
    %v294 = vsub.f32 1.0, %v293
    %v295 = vmul.f32 %v292, %v294
    %v296 = vadd.f32 %v292, %v295
    %vm297 = vweird.f32 %v181
    %vm298 = vweird.f32 %v292
    %vm299 = vmor %vm297, %vm298
    %v300 = vsel %vm299, %v292, %v296
    %v301 = vand.u32 2147483647, %v181
    %vm302 = vcmp.eq.f32.partialorder %v301, 8.507059e+37
    %v303 = vand.u32 %v181, 2147483648
    %v304 = vor.u32 1.1754944e-38, %v303
    %v305 = vsel %vm302, %v304, %v300
    %v306 = vmul.f32 1.0, %v305
    %v307 = vrcp.pop %v182
    %v308 = vmul.f32 %v182, %v307
    %v309 = vsub.f32 1.0, %v308
    %v310 = vmul.f32 %v307, %v309
    %v311 = vadd.f32 %v307, %v310
    %vm312 = vweird.f32 %v182
    %vm313 = vweird.f32 %v307
    %vm314 = vmor %vm312, %vm313
    %v315 = vsel %vm314, %v307, %v311
    %v316 = vand.u32 2147483647, %v182
    %vm317 = vcmp.eq.f32.partialorder %v316, 8.507059e+37
    %v318 = vand.u32 %v182, 2147483648
    %v319 = vor.u32 1.1754944e-38, %v318
    %v320 = vsel %vm317, %v319, %v315
    %v321 = vmul.f32 1.0, %v320
    %v322 = vrcp.pop %v183
    %v323 = vmul.f32 %v183, %v322
    %v324 = vsub.f32 1.0, %v323
    %v325 = vmul.f32 %v322, %v324
    %v326 = vadd.f32 %v322, %v325
    %vm327 = vweird.f32 %v183
    %vm328 = vweird.f32 %v322
    %vm329 = vmor %vm327, %vm328
    %v330 = vsel %vm329, %v322, %v326
    %v331 = vand.u32 2147483647, %v183
    %vm332 = vcmp.eq.f32.partialorder %v331, 8.507059e+37
    %v333 = vand.u32 %v183, 2147483648
    %v334 = vor.u32 1.1754944e-38, %v333
    %v335 = vsel %vm332, %v334, %v330
    %v336 = vmul.f32 1.0, %v335
    %v337 = vrcp.pop %v184
    %v338 = vmul.f32 %v184, %v337
    %v339 = vsub.f32 1.0, %v338
    %v340 = vmul.f32 %v337, %v339
    %v341 = vadd.f32 %v337, %v340
    %vm342 = vweird.f32 %v184
    %vm343 = vweird.f32 %v337
    %vm344 = vmor %vm342, %vm343
    %v345 = vsel %vm344, %v337, %v341
    %v346 = vand.u32 2147483647, %v184
    %vm347 = vcmp.eq.f32.partialorder %v346, 8.507059e+37
    %v348 = vand.u32 %v184, 2147483648
    %v349 = vor.u32 1.1754944e-38, %v348
    %v350 = vsel %vm347, %v349, %v345
    %v351 = vmul.f32 1.0, %v350
    %v352 = vrcp.pop %v185
    %v353 = vmul.f32 %v185, %v352
    %v354 = vsub.f32 1.0, %v353
    %v355 = vmul.f32 %v352, %v354
    %v356 = vadd.f32 %v352, %v355
    %vm357 = vweird.f32 %v185
    %vm358 = vweird.f32 %v352
    %vm359 = vmor %vm357, %vm358
    %v360 = vsel %vm359, %v352, %v356
    %v361 = vand.u32 2147483647, %v185
    %vm362 = vcmp.eq.f32.partialorder %v361, 8.507059e+37
    %v363 = vand.u32 %v185, 2147483648
    %v364 = vor.u32 1.1754944e-38, %v363
    %v365 = vsel %vm362, %v364, %v360
    %v366 = vmul.f32 1.0, %v365
    %v367 = vrcp.pop %v186
    %v368 = vmul.f32 %v186, %v367
    %v369 = vsub.f32 1.0, %v368
    %v370 = vmul.f32 %v367, %v369
    %v371 = vadd.f32 %v367, %v370
    %vm372 = vweird.f32 %v186
    %vm373 = vweird.f32 %v367
    %vm374 = vmor %vm372, %vm373
    %v375 = vsel %vm374, %v367, %v371
    %v376 = vand.u32 2147483647, %v186
    %vm377 = vcmp.eq.f32.partialorder %v376, 8.507059e+37
    %v378 = vand.u32 %v186, 2147483648
    %v379 = vor.u32 1.1754944e-38, %v378
    %v380 = vsel %vm377, %v379, %v375
    %v381 = vmul.f32 1.0, %v380
    %v382 = vmul.f32 %v122, %v201
    %v383 = vmul.f32 %v123, %v216
    %v384 = vmul.f32 %v124, %v231
    %v385 = vmul.f32 %v125, %v246
    %v386 = vmul.f32 %v126, %v261
    %v387 = vmul.f32 %v127, %v276
    %v388 = vmul.f32 %v128, %v291
    %v389 = vmul.f32 %v129, %v306
    %v390 = vmul.f32 %v130, %v321
    %v391 = vmul.f32 %v131, %v336
    %v392 = vmul.f32 %v132, %v351
    %v393 = vmul.f32 %v133, %v366
    %v394 = vmul.f32 %v134, %v381
    %v395 = vpack.c.bf16 %v383, %v382
    %v396 = vpack.c.bf16 %v385, %v384
    %v397 = vpack.c.bf16 %v387, %v386
    %v398 = vpack.c.bf16 %v389, %v388
    %v399 = vpack.c.bf16 %v391, %v390
    %v400 = vpack.c.bf16 %v393, %v392
    %v401 = vpack.c.bf16 %v394, %v394
    %v402 = vld [vmem:[%s2] sm:$0xf]
    %v403 = vld [vmem:[%s2 + $0x4] sm:$0xf]
    %v404 = vld [vmem:[%s2 + $0x8] sm:$0xf]
    %v405 = vld [vmem:[%s2 + $0xc] sm:$0xf]
    %v406 = vld [vmem:[%s2 + $0x10] sm:$0xf]
    %v407 = vld [vmem:[%s2 + $0x14] sm:$0xf]
    %v408 = vld [vmem:[%s2 + $0x18] sm:$0xf]
    %v409 = vld [vmem:[%s2 + $0x1c] sm:$0xf]
    %v410 = vld [vmem:[%s2 + $0x20] sm:$0xf]
    %v411 = vld [vmem:[%s2 + $0x24] sm:$0xf]
    %v412 = vld [vmem:[%s2 + $0x28] sm:$0xf]
    %v413 = vld [vmem:[%s2 + $0x2c] sm:$0xf]
    %v414 = vld [vmem:[%s2 + $0x30] sm:$0xf]
    %v415 = vld [vmem:[%s2 + $0x34] sm:$0xf]
    %v416 = vld [vmem:[%s2 + $0x38] sm:$0xf]
    %v417 = vld [vmem:[%s2 + $0x3c] sm:$0xf]
    %v418 = vld [vmem:[%s3] sm:$0x1]
    %v420 = vperm.slane %v418, 0
    %v438 = vunpack.c.l.b16 %v402
    %v439 = vunpack.c.l.b16 %v403
    %v440 = vunpack.c.l.b16 %v404
    %v441 = vunpack.c.l.b16 %v405
    %v442 = vunpack.c.l.b16 %v406
    %v443 = vunpack.c.l.b16 %v407
    %v444 = vunpack.c.l.b16 %v408
    %v445 = vunpack.c.l.b16 %v409
    %v446 = vunpack.c.l.b16 %v410
    %v447 = vunpack.c.l.b16 %v411
    %v448 = vunpack.c.l.b16 %v412
    %v449 = vunpack.c.l.b16 %v413
    %v450 = vunpack.c.l.b16 %v414
    %v451 = vunpack.c.l.b16 %v415
    %v452 = vunpack.c.l.b16 %v416
    %v453 = vunpack.c.l.b16 %v417
    %v454 = vpack.c.b16 %v439, %v438
    %v455 = vpack.c.b16 %v441, %v440
    %v456 = vpack.c.b16 %v443, %v442
    %v457 = vpack.c.b16 %v445, %v444
    %v458 = vpack.c.b16 %v447, %v446
    %v459 = vpack.c.b16 %v449, %v448
    %v460 = vpack.c.b16 %v451, %v450
    %v461 = vpack.c.b16 %v453, %v452
    %470 = vmatpush.bf16.msra.mxu0 %v461
    %471 = vmatpush.bf16.msra.mxu0 %v460
    %472 = vmatpush.bf16.msra.mxu0 %v459
    %473 = vmatpush.bf16.msra.mxu0 %v458
    %474 = vmatpush.bf16.msra.mxu0 %v457
    %475 = vmatpush.bf16.msra.mxu0 %v456
    %476 = vmatpush.bf16.msra.mxu0 %v455
    %477 = vmatpush.bf16.msra.mxu0 %v454
    %478 = vmatmul.bf16.gmra.mxu0 %v395
    %v479 = vpop.f32.mrf.mxu0
    %v480 = vadd.f32 %v420, %v479
    %v481 = vpop.f32.mrf.mxu0
    %v482 = vadd.f32 %v420, %v481
    %483 = vmatmul.bf16.gmra.mxu0 %v396
    %v484 = vpop.f32.mrf.mxu0
    %v485 = vadd.f32 %v420, %v484
    %v486 = vpop.f32.mrf.mxu0
    %v487 = vadd.f32 %v420, %v486
    %488 = vmatmul.bf16.gmra.mxu0 %v397
    %v489 = vpop.f32.mrf.mxu0
    %v490 = vadd.f32 %v420, %v489
    %v491 = vpop.f32.mrf.mxu0
    %v492 = vadd.f32 %v420, %v491
    %493 = vmatmul.bf16.gmra.mxu0 %v398
    %v494 = vpop.f32.mrf.mxu0
    %v495 = vadd.f32 %v420, %v494
    %v496 = vpop.f32.mrf.mxu0
    %v497 = vadd.f32 %v420, %v496
    %498 = vmatmul.bf16.gmra.mxu0 %v399
    %v499 = vpop.f32.mrf.mxu0
    %v500 = vadd.f32 %v420, %v499
    %v501 = vpop.f32.mrf.mxu0
    %v502 = vadd.f32 %v420, %v501
    %503 = vmatmul.bf16.gmra.mxu0 %v400
    %v504 = vpop.f32.mrf.mxu0
    %v505 = vadd.f32 %v420, %v504
    %v506 = vpop.f32.mrf.mxu0
    %v507 = vadd.f32 %v420, %v506
    %508 = vmatmul.bf16.gmra.mxu0 %v401
    %v509 = vpop.f32.mrf.mxu0
    %v510 = vadd.f32 %v420, %v509
    %v511 = vpop.f32.mrf.mxu0
    %512 = vdwg.mxu0
    %v513 = vxor.u32 %v480, 2147483648
    %v514 = vxor.u32 %v482, 2147483648
    %v515 = vxor.u32 %v485, 2147483648
    %v516 = vxor.u32 %v487, 2147483648
    %v517 = vxor.u32 %v490, 2147483648
    %v518 = vxor.u32 %v492, 2147483648
    %v519 = vxor.u32 %v495, 2147483648
    %v520 = vxor.u32 %v497, 2147483648
    %v521 = vxor.u32 %v500, 2147483648
    %v522 = vxor.u32 %v502, 2147483648
    %v523 = vxor.u32 %v505, 2147483648
    %v524 = vxor.u32 %v507, 2147483648
    %v525 = vxor.u32 %v510, 2147483648
    %v526 = vmul.f32 %v513, 1.442695
    %v527 = vpow.pop %v526
    %v528 = vmul.f32 %v514, 1.442695
    %v529 = vpow.pop %v528
    %v530 = vmul.f32 %v515, 1.442695
    %v531 = vpow.pop %v530
    %v532 = vmul.f32 %v516, 1.442695
    %v533 = vpow.pop %v532
    %v534 = vmul.f32 %v517, 1.442695
    %v535 = vpow.pop %v534
    %v536 = vmul.f32 %v518, 1.442695
    %v537 = vpow.pop %v536
    %v538 = vmul.f32 %v519, 1.442695
    %v539 = vpow.pop %v538
    %v540 = vmul.f32 %v520, 1.442695
    %v541 = vpow.pop %v540
    %v542 = vmul.f32 %v521, 1.442695
    %v543 = vpow.pop %v542
    %v544 = vmul.f32 %v522, 1.442695
    %v545 = vpow.pop %v544
    %v546 = vmul.f32 %v523, 1.442695
    %v547 = vpow.pop %v546
    %v548 = vmul.f32 %v524, 1.442695
    %v549 = vpow.pop %v548
    %v550 = vmul.f32 %v525, 1.442695
    %v551 = vpow.pop %v550
    %v552 = vadd.f32 %v527, 1.0
    %v553 = vadd.f32 %v529, 1.0
    %v554 = vadd.f32 %v531, 1.0
    %v555 = vadd.f32 %v533, 1.0
    %v556 = vadd.f32 %v535, 1.0
    %v557 = vadd.f32 %v537, 1.0
    %v558 = vadd.f32 %v539, 1.0
    %v559 = vadd.f32 %v541, 1.0
    %v560 = vadd.f32 %v543, 1.0
    %v561 = vadd.f32 %v545, 1.0
    %v562 = vadd.f32 %v547, 1.0
    %v563 = vadd.f32 %v549, 1.0
    %v564 = vadd.f32 %v551, 1.0
    %v565 = vrcp.pop %v552
    %v566 = vmul.f32 %v552, %v565
    %v567 = vsub.f32 1.0, %v566
    %v568 = vmul.f32 %v565, %v567
    %v569 = vadd.f32 %v565, %v568
    %vm570 = vweird.f32 %v552
    %vm571 = vweird.f32 %v565
    %vm572 = vmor %vm570, %vm571
    %v573 = vsel %vm572, %v565, %v569
    %v574 = vand.u32 2147483647, %v552
    %vm575 = vcmp.eq.f32.partialorder %v574, 8.507059e+37
    %v576 = vand.u32 %v552, 2147483648
    %v577 = vor.u32 1.1754944e-38, %v576
    %v578 = vsel %vm575, %v577, %v573
    %v579 = vmul.f32 1.0, %v578
    %v580 = vrcp.pop %v553
    %v581 = vmul.f32 %v553, %v580
    %v582 = vsub.f32 1.0, %v581
    %v583 = vmul.f32 %v580, %v582
    %v584 = vadd.f32 %v580, %v583
    %vm585 = vweird.f32 %v553
    %vm586 = vweird.f32 %v580
    %vm587 = vmor %vm585, %vm586
    %v588 = vsel %vm587, %v580, %v584
    %v589 = vand.u32 2147483647, %v553
    %vm590 = vcmp.eq.f32.partialorder %v589, 8.507059e+37
    %v591 = vand.u32 %v553, 2147483648
    %v592 = vor.u32 1.1754944e-38, %v591
    %v593 = vsel %vm590, %v592, %v588
    %v594 = vmul.f32 1.0, %v593
    %v595 = vrcp.pop %v554
    %v596 = vmul.f32 %v554, %v595
    %v597 = vsub.f32 1.0, %v596
    %v598 = vmul.f32 %v595, %v597
    %v599 = vadd.f32 %v595, %v598
    %vm600 = vweird.f32 %v554
    %vm601 = vweird.f32 %v595
    %vm602 = vmor %vm600, %vm601
    %v603 = vsel %vm602, %v595, %v599
    %v604 = vand.u32 2147483647, %v554
    %vm605 = vcmp.eq.f32.partialorder %v604, 8.507059e+37
    %v606 = vand.u32 %v554, 2147483648
    %v607 = vor.u32 1.1754944e-38, %v606
    %v608 = vsel %vm605, %v607, %v603
    %v609 = vmul.f32 1.0, %v608
    %v610 = vrcp.pop %v555
    %v611 = vmul.f32 %v555, %v610
    %v612 = vsub.f32 1.0, %v611
    %v613 = vmul.f32 %v610, %v612
    %v614 = vadd.f32 %v610, %v613
    %vm615 = vweird.f32 %v555
    %vm616 = vweird.f32 %v610
    %vm617 = vmor %vm615, %vm616
    %v618 = vsel %vm617, %v610, %v614
    %v619 = vand.u32 2147483647, %v555
    %vm620 = vcmp.eq.f32.partialorder %v619, 8.507059e+37
    %v621 = vand.u32 %v555, 2147483648
    %v622 = vor.u32 1.1754944e-38, %v621
    %v623 = vsel %vm620, %v622, %v618
    %v624 = vmul.f32 1.0, %v623
    %v625 = vrcp.pop %v556
    %v626 = vmul.f32 %v556, %v625
    %v627 = vsub.f32 1.0, %v626
    %v628 = vmul.f32 %v625, %v627
    %v629 = vadd.f32 %v625, %v628
    %vm630 = vweird.f32 %v556
    %vm631 = vweird.f32 %v625
    %vm632 = vmor %vm630, %vm631
    %v633 = vsel %vm632, %v625, %v629
    %v634 = vand.u32 2147483647, %v556
    %vm635 = vcmp.eq.f32.partialorder %v634, 8.507059e+37
    %v636 = vand.u32 %v556, 2147483648
    %v637 = vor.u32 1.1754944e-38, %v636
    %v638 = vsel %vm635, %v637, %v633
    %v639 = vmul.f32 1.0, %v638
    %v640 = vrcp.pop %v557
    %v641 = vmul.f32 %v557, %v640
    %v642 = vsub.f32 1.0, %v641
    %v643 = vmul.f32 %v640, %v642
    %v644 = vadd.f32 %v640, %v643
    %vm645 = vweird.f32 %v557
    %vm646 = vweird.f32 %v640
    %vm647 = vmor %vm645, %vm646
    %v648 = vsel %vm647, %v640, %v644
    %v649 = vand.u32 2147483647, %v557
    %vm650 = vcmp.eq.f32.partialorder %v649, 8.507059e+37
    %v651 = vand.u32 %v557, 2147483648
    %v652 = vor.u32 1.1754944e-38, %v651
    %v653 = vsel %vm650, %v652, %v648
    %v654 = vmul.f32 1.0, %v653
    %v655 = vrcp.pop %v558
    %v656 = vmul.f32 %v558, %v655
    %v657 = vsub.f32 1.0, %v656
    %v658 = vmul.f32 %v655, %v657
    %v659 = vadd.f32 %v655, %v658
    %vm660 = vweird.f32 %v558
    %vm661 = vweird.f32 %v655
    %vm662 = vmor %vm660, %vm661
    %v663 = vsel %vm662, %v655, %v659
    %v664 = vand.u32 2147483647, %v558
    %vm665 = vcmp.eq.f32.partialorder %v664, 8.507059e+37
    %v666 = vand.u32 %v558, 2147483648
    %v667 = vor.u32 1.1754944e-38, %v666
    %v668 = vsel %vm665, %v667, %v663
    %v669 = vmul.f32 1.0, %v668
    %v670 = vrcp.pop %v559
    %v671 = vmul.f32 %v559, %v670
    %v672 = vsub.f32 1.0, %v671
    %v673 = vmul.f32 %v670, %v672
    %v674 = vadd.f32 %v670, %v673
    %vm675 = vweird.f32 %v559
    %vm676 = vweird.f32 %v670
    %vm677 = vmor %vm675, %vm676
    %v678 = vsel %vm677, %v670, %v674
    %v679 = vand.u32 2147483647, %v559
    %vm680 = vcmp.eq.f32.partialorder %v679, 8.507059e+37
    %v681 = vand.u32 %v559, 2147483648
    %v682 = vor.u32 1.1754944e-38, %v681
    %v683 = vsel %vm680, %v682, %v678
    %v684 = vmul.f32 1.0, %v683
    %v685 = vrcp.pop %v560
    %v686 = vmul.f32 %v560, %v685
    %v687 = vsub.f32 1.0, %v686
    %v688 = vmul.f32 %v685, %v687
    %v689 = vadd.f32 %v685, %v688
    %vm690 = vweird.f32 %v560
    %vm691 = vweird.f32 %v685
    %vm692 = vmor %vm690, %vm691
    %v693 = vsel %vm692, %v685, %v689
    %v694 = vand.u32 2147483647, %v560
    %vm695 = vcmp.eq.f32.partialorder %v694, 8.507059e+37
    %v696 = vand.u32 %v560, 2147483648
    %v697 = vor.u32 1.1754944e-38, %v696
    %v698 = vsel %vm695, %v697, %v693
    %v699 = vmul.f32 1.0, %v698
    %v700 = vrcp.pop %v561
    %v701 = vmul.f32 %v561, %v700
    %v702 = vsub.f32 1.0, %v701
    %v703 = vmul.f32 %v700, %v702
    %v704 = vadd.f32 %v700, %v703
    %vm705 = vweird.f32 %v561
    %vm706 = vweird.f32 %v700
    %vm707 = vmor %vm705, %vm706
    %v708 = vsel %vm707, %v700, %v704
    %v709 = vand.u32 2147483647, %v561
    %vm710 = vcmp.eq.f32.partialorder %v709, 8.507059e+37
    %v711 = vand.u32 %v561, 2147483648
    %v712 = vor.u32 1.1754944e-38, %v711
    %v713 = vsel %vm710, %v712, %v708
    %v714 = vmul.f32 1.0, %v713
    %v715 = vrcp.pop %v562
    %v716 = vmul.f32 %v562, %v715
    %v717 = vsub.f32 1.0, %v716
    %v718 = vmul.f32 %v715, %v717
    %v719 = vadd.f32 %v715, %v718
    %vm720 = vweird.f32 %v562
    %vm721 = vweird.f32 %v715
    %vm722 = vmor %vm720, %vm721
    %v723 = vsel %vm722, %v715, %v719
    %v724 = vand.u32 2147483647, %v562
    %vm725 = vcmp.eq.f32.partialorder %v724, 8.507059e+37
    %v726 = vand.u32 %v562, 2147483648
    %v727 = vor.u32 1.1754944e-38, %v726
    %v728 = vsel %vm725, %v727, %v723
    %v729 = vmul.f32 1.0, %v728
    %v730 = vrcp.pop %v563
    %v731 = vmul.f32 %v563, %v730
    %v732 = vsub.f32 1.0, %v731
    %v733 = vmul.f32 %v730, %v732
    %v734 = vadd.f32 %v730, %v733
    %vm735 = vweird.f32 %v563
    %vm736 = vweird.f32 %v730
    %vm737 = vmor %vm735, %vm736
    %v738 = vsel %vm737, %v730, %v734
    %v739 = vand.u32 2147483647, %v563
    %vm740 = vcmp.eq.f32.partialorder %v739, 8.507059e+37
    %v741 = vand.u32 %v563, 2147483648
    %v742 = vor.u32 1.1754944e-38, %v741
    %v743 = vsel %vm740, %v742, %v738
    %v744 = vmul.f32 1.0, %v743
    %v745 = vrcp.pop %v564
    %v746 = vmul.f32 %v564, %v745
    %v747 = vsub.f32 1.0, %v746
    %v748 = vmul.f32 %v745, %v747
    %v749 = vadd.f32 %v745, %v748
    %vm750 = vweird.f32 %v564
    %vm751 = vweird.f32 %v745
    %vm752 = vmor %vm750, %vm751
    %v753 = vsel %vm752, %v745, %v749
    %v754 = vand.u32 2147483647, %v564
    %vm755 = vcmp.eq.f32.partialorder %v754, 8.507059e+37
    %v756 = vand.u32 %v564, 2147483648
    %v757 = vor.u32 1.1754944e-38, %v756
    %v758 = vsel %vm755, %v757, %v753
    %v759 = vmul.f32 1.0, %v758
    %v760 = vmul.f32 %v480, %v579
    %v761 = vmul.f32 %v482, %v594
    %v762 = vmul.f32 %v485, %v609
    %v763 = vmul.f32 %v487, %v624
    %v764 = vmul.f32 %v490, %v639
    %v765 = vmul.f32 %v492, %v654
    %v766 = vmul.f32 %v495, %v669
    %v767 = vmul.f32 %v497, %v684
    %v768 = vmul.f32 %v500, %v699
    %v769 = vmul.f32 %v502, %v714
    %v770 = vmul.f32 %v505, %v729
    %v771 = vmul.f32 %v507, %v744
    %v772 = vmul.f32 %v510, %v759
    %v773 = vpack.c.bf16 %v761, %v760
    %v774 = vpack.c.bf16 %v763, %v762
    %v775 = vpack.c.bf16 %v765, %v764
    %v776 = vpack.c.bf16 %v767, %v766
    %v777 = vpack.c.bf16 %v769, %v768
    %v778 = vpack.c.bf16 %v771, %v770
    %v779 = vpack.c.bf16 %v772, %v772
    %v780 = vld [vmem:[#allocation2] sm:$0xf]
    %v781 = vld [vmem:[#allocation2 + $0x4] sm:$0xf]
    %v782 = vld [vmem:[#allocation2 + $0x8] sm:$0xf]
    %v783 = vld [vmem:[#allocation2 + $0xc] sm:$0xf]
    %v784 = vld [vmem:[#allocation2 + $0x10] sm:$0xf]
    %v785 = vld [vmem:[#allocation2 + $0x14] sm:$0xf]
    %v786 = vld [vmem:[#allocation2 + $0x18] sm:$0xf]
    %v787 = vld [vmem:[#allocation2 + $0x1c] sm:$0xf]
    %v788 = vld [vmem:[#allocation2 + $0x20] sm:$0xf]
    %v789 = vld [vmem:[#allocation2 + $0x24] sm:$0xf]
    %v790 = vld [vmem:[#allocation2 + $0x28] sm:$0xf]
    %v791 = vld [vmem:[#allocation2 + $0x2c] sm:$0xf]
    %v792 = vld [vmem:[#allocation2 + $0x30] sm:$0xf]
    %v793 = vld [vmem:[#allocation2 + $0x34] sm:$0xf]
    %v794 = vld [vmem:[#allocation2 + $0x38] sm:$0xf]
    %v795 = vld [vmem:[#allocation2 + $0x3c] sm:$0xf]
    %v796 = vld [vmem:[%s5] sm:$0x1]
    %v798 = vperm.slane %v796, 0
    %v816 = vunpack.c.l.b16 %v780
    %v817 = vunpack.c.l.b16 %v781
    %v818 = vunpack.c.l.b16 %v782
    %v819 = vunpack.c.l.b16 %v783
    %v820 = vunpack.c.l.b16 %v784
    %v821 = vunpack.c.l.b16 %v785
    %v822 = vunpack.c.l.b16 %v786
    %v823 = vunpack.c.l.b16 %v787
    %v824 = vunpack.c.l.b16 %v788
    %v825 = vunpack.c.l.b16 %v789
    %v826 = vunpack.c.l.b16 %v790
    %v827 = vunpack.c.l.b16 %v791
    %v828 = vunpack.c.l.b16 %v792
    %v829 = vunpack.c.l.b16 %v793
    %v830 = vunpack.c.l.b16 %v794
    %v831 = vunpack.c.l.b16 %v795
    %v832 = vpack.c.b16 %v817, %v816
    %v833 = vpack.c.b16 %v819, %v818
    %v834 = vpack.c.b16 %v821, %v820
    %v835 = vpack.c.b16 %v823, %v822
    %v836 = vpack.c.b16 %v825, %v824
    %v837 = vpack.c.b16 %v827, %v826
    %v838 = vpack.c.b16 %v829, %v828
    %v839 = vpack.c.b16 %v831, %v830
    %848 = vmatpush.bf16.msra.mxu0 %v839
    %849 = vmatpush.bf16.msra.mxu0 %v838
    %850 = vmatpush.bf16.msra.mxu0 %v837
    %851 = vmatpush.bf16.msra.mxu0 %v836
    %852 = vmatpush.bf16.msra.mxu0 %v835
    %853 = vmatpush.bf16.msra.mxu0 %v834
    %854 = vmatpush.bf16.msra.mxu0 %v833
    %855 = vmatpush.bf16.msra.mxu0 %v832
    %856 = vmatmul.bf16.gmra.mxu0 %v773
    %v857 = vpop.f32.mrf.mxu0
    %v858 = vadd.f32 %v798, %v857
    %v859 = vpop.f32.mrf.mxu0
    %v860 = vadd.f32 %v798, %v859
    %861 = vmatmul.bf16.gmra.mxu0 %v774
    %v862 = vpop.f32.mrf.mxu0
    %v863 = vadd.f32 %v798, %v862
    %v864 = vpop.f32.mrf.mxu0
    %v865 = vadd.f32 %v798, %v864
    %866 = vmatmul.bf16.gmra.mxu0 %v775
    %v867 = vpop.f32.mrf.mxu0
    %v868 = vadd.f32 %v798, %v867
    %v869 = vpop.f32.mrf.mxu0
    %v870 = vadd.f32 %v798, %v869
    %871 = vmatmul.bf16.gmra.mxu0 %v776
    %v872 = vpop.f32.mrf.mxu0
    %v873 = vadd.f32 %v798, %v872
    %v874 = vpop.f32.mrf.mxu0
    %v875 = vadd.f32 %v798, %v874
    %876 = vmatmul.bf16.gmra.mxu0 %v777
    %v877 = vpop.f32.mrf.mxu0
    %v878 = vadd.f32 %v798, %v877
    %v879 = vpop.f32.mrf.mxu0
    %v880 = vadd.f32 %v798, %v879
    %881 = vmatmul.bf16.gmra.mxu0 %v778
    %v882 = vpop.f32.mrf.mxu0
    %v883 = vadd.f32 %v798, %v882
    %v884 = vpop.f32.mrf.mxu0
    %v885 = vadd.f32 %v798, %v884
    %886 = vmatmul.bf16.gmra.mxu0 %v779
    %v887 = vpop.f32.mrf.mxu0
    %v888 = vadd.f32 %v798, %v887
    %v889 = vpop.f32.mrf.mxu0
    %890 = vdwg.mxu0
    %v891 = vadd.f32 %v122, %v858
    %v892 = vadd.f32 %v123, %v860
    %v893 = vadd.f32 %v124, %v863
    %v894 = vadd.f32 %v125, %v865
    %v895 = vadd.f32 %v126, %v868
    %v896 = vadd.f32 %v127, %v870
    %v897 = vadd.f32 %v128, %v873
    %v898 = vadd.f32 %v129, %v875
    %v899 = vadd.f32 %v130, %v878
    %v900 = vadd.f32 %v131, %v880
    %v901 = vadd.f32 %v132, %v883
    %v902 = vadd.f32 %v133, %v885
    %v903 = vadd.f32 %v134, %v888
    %904 = vst [vmem:[#allocation5] sm:$0xff] %v891
    %905 = vst [vmem:[#allocation5 + $0x8] sm:$0xff] %v892
    %906 = vst [vmem:[#allocation5 + $0x10] sm:$0xff] %v893
    %907 = vst [vmem:[#allocation5 + $0x18] sm:$0xff] %v894
    %908 = vst [vmem:[#allocation5 + $0x20] sm:$0xff] %v895
    %909 = vst [vmem:[#allocation5 + $0x28] sm:$0xff] %v896
    %910 = vst [vmem:[#allocation5 + $0x30] sm:$0xff] %v897
    %911 = vst [vmem:[#allocation5 + $0x38] sm:$0xff] %v898
    %912 = vst [vmem:[#allocation5 + $0x40] sm:$0xff] %v899
    %913 = vst [vmem:[#allocation5 + $0x48] sm:$0xff] %v900
    %914 = vst [vmem:[#allocation5 + $0x50] sm:$0xff] %v901
    %915 = vst [vmem:[#allocation5 + $0x58] sm:$0xff] %v902
    %916 = vst [vmem:[#allocation5 + $0x60] sm:$0xff] %v903
    // Predicated region
    $region30: #{tpu_custom_call.1} parent=1 // pred_check
      _
    $region31: #{tpu_custom_call.1} parent=1 // pred_check_branch
      %918 = sbr.rel (0) target = $region33
    $region32: #{tpu_custom_call.1} parent=1 // pred_region
      %920 = vsyncadd [#allocation4], 0
      %s921 = sshll.u32 [#allocation5], 4
      %s922 = int_to_ptr.vmem [resolvable:$true] %s921
      %s923 = sshll.u32 %s6, 4
      %s924 = int_to_ptr.hbm [resolvable:$true] %s923
      %929 = dma.vmem_to_hbm [thread:$0]  %s922, 1664, %s924, [#allocation4], 128, 128, 8
    $region33: #{tpu_custom_call.1} parent=1 // pred_fallthru
      _
    // Predicated region
    $region34: #{tpu_custom_call.1} parent=1 // pred_check
      _
    $region35: #{tpu_custom_call.1} parent=1 // pred_check_branch
      %931 = sbr.rel (0) target = $region37
    $region36: #{tpu_custom_call.1} parent=1 // pred_region
      %933 = dma.done [#allocation4], 1664
    $region37: #{tpu_custom_call.1} parent=1 // pred_fallthru
      _
    %934 = vsyncpa [#allocation3], 1
    %935 = vsyncpa [#allocation4], 1

// kernel: tpu_custom_call.1
$region0: #{tpu_custom_call.1}
  #allocation0 [shape = 'u32[]', space=smem, size = 0x4, offset = 0x4, fixed_abs, tag = 'smem constant byte address 0x4 - core index']
  #allocation1 [shape = 'u32[72,128]{1,0:T(1,128)}', space=vmem, size = 0x9000, scoped, tag = 'internal scratch']
  %s0 = inlined_call_operand.vmem [shape: f32[104,1], index: 0, kind: input, shape index: {}]
  %s1 = inlined_call_operand.vmem [shape: f32[1,128], index: 1, kind: input, shape index: {}]
  %s2 = inlined_call_operand.vmem [shape: bf16[128,128], index: 2, kind: input, shape index: {}]
  %s3 = inlined_call_operand.vmem [shape: f32[1,128], index: 3, kind: input, shape index: {}]
  %s4 = inlined_call_operand.hbm [shape: bf16[128,128], index: 4, kind: input, shape index: {}]
  %s5 = inlined_call_operand.vmem [shape: f32[1,128], index: 5, kind: input, shape index: {}]
  %s6 = inlined_call_operand.hbm [shape: f32[104,128], index: 6, kind: output, shape index: {}]
  %s7 = sld [smem:[#allocation0]]
  $region38: #{tpu_custom_call.1} parent=0
    _
  %s9 = ssub.s32 1, %s7
  %s10 = scalar_select 0, %s9, %s7
  $region1: #{tpu_custom_call.1} parent=0
    #allocation2 [shape = 'u8[32768]{0}', space=vmem, size = 0x8000, scoped, tag = 'input window, operand 4, single buffered']
    #allocation3 [shape = 's32[1]{0}', space=sflag, size = 0x4, scoped, tag = 'scoped memory for tpu_custom_call.1']
    #allocation4 [shape = 's32[1]{0}', space=sflag, size = 0x4, scoped, tag = 'scoped memory for tpu_custom_call.1']
    #allocation5 [shape = 'u8[53248]{0}', space=vmem, size = 0xd000, scoped, tag = 'output window, operand 0, single buffered']
    %11 = vsyncpa [#allocation3], 0
    %12 = vsyncpa [#allocation4], 0
    // Predicated region
    $region2: #{tpu_custom_call.1} parent=1 // pred_check
      _
    $region3: #{tpu_custom_call.1} parent=1 // pred_check_branch
      %14 = sbr.rel (0) target = $region5
    $region4: #{tpu_custom_call.1} parent=1 // pred_region
      _
    $region5: #{tpu_custom_call.1} parent=1 // pred_fallthru
      _
    // Predicated region
    $region6: #{tpu_custom_call.1} parent=1 // pred_check
      _
    $region7: #{tpu_custom_call.1} parent=1 // pred_check_branch
      %16 = sbr.rel (0) target = $region9
    $region8: #{tpu_custom_call.1} parent=1 // pred_region
      _
    $region9: #{tpu_custom_call.1} parent=1 // pred_fallthru
      _
    // Predicated region
    $region10: #{tpu_custom_call.1} parent=1 // pred_check
      _
    $region11: #{tpu_custom_call.1} parent=1 // pred_check_branch
      %18 = sbr.rel (0) target = $region13
    $region12: #{tpu_custom_call.1} parent=1 // pred_region
      _
    $region13: #{tpu_custom_call.1} parent=1 // pred_fallthru
      _
    // Predicated region
    $region14: #{tpu_custom_call.1} parent=1 // pred_check
      _
    $region15: #{tpu_custom_call.1} parent=1 // pred_check_branch
      %20 = sbr.rel (0) target = $region17
    $region16: #{tpu_custom_call.1} parent=1 // pred_region
      _
    $region17: #{tpu_custom_call.1} parent=1 // pred_fallthru
      _
    // Predicated region
    $region18: #{tpu_custom_call.1} parent=1 // pred_check
      _
    $region19: #{tpu_custom_call.1} parent=1 // pred_check_branch
      %22 = sbr.rel (0) target = $region21
    $region20: #{tpu_custom_call.1} parent=1 // pred_region
      %24 = vsyncadd [#allocation3], 0
      %s25 = sshll.u32 %s4, 4
      %s26 = int_to_ptr.hbm [resolvable:$true] %s25
      %s27 = sshll.u32 [#allocation2], 4
      %s28 = int_to_ptr.vmem [resolvable:$true] %s27
      %33 = dma.hbm_to_vmem [thread:$0]  %s26, 1024, %s28, [#allocation3], 64, 64, 4
    $region21: #{tpu_custom_call.1} parent=1 // pred_fallthru
      _
    // Predicated region
    $region22: #{tpu_custom_call.1} parent=1 // pred_check
      _
    $region23: #{tpu_custom_call.1} parent=1 // pred_check_branch
      %35 = sbr.rel (0) target = $region25
    $region24: #{tpu_custom_call.1} parent=1 // pred_region
      _
    $region25: #{tpu_custom_call.1} parent=1 // pred_fallthru
      _
    // Predicated region
    $region26: #{tpu_custom_call.1} parent=1 // pred_check
      _
    $region27: #{tpu_custom_call.1} parent=1 // pred_check_branch
      %37 = sbr.rel (0) target = $region29
    $region28: #{tpu_custom_call.1} parent=1 // pred_region
      %39 = dma.done [#allocation3], 1024
    $region29: #{tpu_custom_call.1} parent=1 // pred_fallthru
      _
    %v40 = vld [vmem:[%s0] sm:$0xff]
    %v41 = vld [vmem:[%s0 + $0x8] sm:$0xff]
    %v42 = vld [vmem:[%s0 + $0x10] sm:$0xff]
    %v43 = vld [vmem:[%s0 + $0x18] sm:$0xff]
    %v44 = vld [vmem:[%s0 + $0x20] sm:$0xff]
    %v45 = vld [vmem:[%s0 + $0x28] sm:$0xff]
    %v46 = vld [vmem:[%s0 + $0x30] sm:$0xff]
    %v47 = vld [vmem:[%s0 + $0x38] sm:$0xff]
    %v48 = vld [vmem:[%s0 + $0x40] sm:$0xff]
    %v49 = vld [vmem:[%s0 + $0x48] sm:$0xff]
    %v50 = vld [vmem:[%s0 + $0x50] sm:$0xff]
    %v51 = vld [vmem:[%s0 + $0x58] sm:$0xff]
    %v52 = vld [vmem:[%s0 + $0x60] sm:$0xff]
    %v53 = vld [vmem:[%s1] sm:$0x1]
    %55 = vset.pattern.permute.xlu0 0
    %56 = vperm.xlu0 %55, %v40
    %v57 = vpop.permute.xlu0 %56
    %60 = vset.pattern.permute.xlu0 0
    %61 = vperm.xlu0 %60, %v41
    %v62 = vpop.permute.xlu0 %61
    %65 = vset.pattern.permute.xlu0 0
    %66 = vperm.xlu0 %65, %v42
    %v67 = vpop.permute.xlu0 %66
    %70 = vset.pattern.permute.xlu0 0
    %71 = vperm.xlu0 %70, %v43
    %v72 = vpop.permute.xlu0 %71
    %75 = vset.pattern.permute.xlu0 0
    %76 = vperm.xlu0 %75, %v44
    %v77 = vpop.permute.xlu0 %76
    %80 = vset.pattern.permute.xlu0 0
    %81 = vperm.xlu0 %80, %v45
    %v82 = vpop.permute.xlu0 %81
    %85 = vset.pattern.permute.xlu0 0
    %86 = vperm.xlu0 %85, %v46
    %v87 = vpop.permute.xlu0 %86
    %90 = vset.pattern.permute.xlu0 0
    %91 = vperm.xlu0 %90, %v47
    %v92 = vpop.permute.xlu0 %91
    %95 = vset.pattern.permute.xlu0 0
    %96 = vperm.xlu0 %95, %v48
    %v97 = vpop.permute.xlu0 %96
    %100 = vset.pattern.permute.xlu0 0
    %101 = vperm.xlu0 %100, %v49
    %v102 = vpop.permute.xlu0 %101
    %105 = vset.pattern.permute.xlu0 0
    %106 = vperm.xlu0 %105, %v50
    %v107 = vpop.permute.xlu0 %106
    %110 = vset.pattern.permute.xlu0 0
    %111 = vperm.xlu0 %110, %v51
    %v112 = vpop.permute.xlu0 %111
    %115 = vset.pattern.permute.xlu0 0
    %116 = vperm.xlu0 %115, %v52
    %v117 = vpop.permute.xlu0 %116
    %v120 = vperm.slane %v53, 0
    %v122 = vmul.f32 %v57, %v120
    %v123 = vmul.f32 %v62, %v120
    %v124 = vmul.f32 %v67, %v120
    %v125 = vmul.f32 %v72, %v120
    %v126 = vmul.f32 %v77, %v120
    %v127 = vmul.f32 %v82, %v120
    %v128 = vmul.f32 %v87, %v120
    %v129 = vmul.f32 %v92, %v120
    %v130 = vmul.f32 %v97, %v120
    %v131 = vmul.f32 %v102, %v120
    %v132 = vmul.f32 %v107, %v120
    %v133 = vmul.f32 %v112, %v120
    %v134 = vmul.f32 %v117, %v120
    %v135 = vxor.u32 %v122, 2147483648
    %v136 = vxor.u32 %v123, 2147483648
    %v137 = vxor.u32 %v124, 2147483648
    %v138 = vxor.u32 %v125, 2147483648
    %v139 = vxor.u32 %v126, 2147483648
    %v140 = vxor.u32 %v127, 2147483648
    %v141 = vxor.u32 %v128, 2147483648
    %v142 = vxor.u32 %v129, 2147483648
    %v143 = vxor.u32 %v130, 2147483648
    %v144 = vxor.u32 %v131, 2147483648
    %v145 = vxor.u32 %v132, 2147483648
    %v146 = vxor.u32 %v133, 2147483648
    %v147 = vxor.u32 %v134, 2147483648
    %v148 = vmul.f32 %v135, 1.442695
    %v149 = vpow.pop %v148
    %v150 = vmul.f32 %v136, 1.442695
    %v151 = vpow.pop %v150
    %v152 = vmul.f32 %v137, 1.442695
    %v153 = vpow.pop %v152
    %v154 = vmul.f32 %v138, 1.442695
    %v155 = vpow.pop %v154
    %v156 = vmul.f32 %v139, 1.442695
    %v157 = vpow.pop %v156
    %v158 = vmul.f32 %v140, 1.442695
    %v159 = vpow.pop %v158
    %v160 = vmul.f32 %v141, 1.442695
    %v161 = vpow.pop %v160
    %v162 = vmul.f32 %v142, 1.442695
    %v163 = vpow.pop %v162
    %v164 = vmul.f32 %v143, 1.442695
    %v165 = vpow.pop %v164
    %v166 = vmul.f32 %v144, 1.442695
    %v167 = vpow.pop %v166
    %v168 = vmul.f32 %v145, 1.442695
    %v169 = vpow.pop %v168
    %v170 = vmul.f32 %v146, 1.442695
    %v171 = vpow.pop %v170
    %v172 = vmul.f32 %v147, 1.442695
    %v173 = vpow.pop %v172
    %v174 = vadd.f32 %v149, 1.0
    %v175 = vadd.f32 %v151, 1.0
    %v176 = vadd.f32 %v153, 1.0
    %v177 = vadd.f32 %v155, 1.0
    %v178 = vadd.f32 %v157, 1.0
    %v179 = vadd.f32 %v159, 1.0
    %v180 = vadd.f32 %v161, 1.0
    %v181 = vadd.f32 %v163, 1.0
    %v182 = vadd.f32 %v165, 1.0
    %v183 = vadd.f32 %v167, 1.0
    %v184 = vadd.f32 %v169, 1.0
    %v185 = vadd.f32 %v171, 1.0
    %v186 = vadd.f32 %v173, 1.0
    %v187 = vrcp.pop %v174
    %v188 = vmul.f32 %v174, %v187
    %v189 = vsub.f32 1.0, %v188
    %v190 = vmul.f32 %v187, %v189
    %v191 = vadd.f32 %v187, %v190
    %vm192 = vweird.f32 %v174
    %vm193 = vweird.f32 %v187
    %vm194 = vmor %vm192, %vm193
    %v195 = vsel %vm194, %v187, %v191
    %v196 = vand.u32 2147483647, %v174
    %vm197 = vcmp.eq.f32.partialorder %v196, 8.507059e+37
    %v198 = vand.u32 %v174, 2147483648
    %v199 = vor.u32 1.1754944e-38, %v198
    %v200 = vsel %vm197, %v199, %v195
    %v201 = vmul.f32 1.0, %v200
    %v202 = vrcp.pop %v175
    %v203 = vmul.f32 %v175, %v202
    %v204 = vsub.f32 1.0, %v203
    %v205 = vmul.f32 %v202, %v204
    %v206 = vadd.f32 %v202, %v205
    %vm207 = vweird.f32 %v175
    %vm208 = vweird.f32 %v202
    %vm209 = vmor %vm207, %vm208
    %v210 = vsel %vm209, %v202, %v206
    %v211 = vand.u32 2147483647, %v175
    %vm212 = vcmp.eq.f32.partialorder %v211, 8.507059e+37
    %v213 = vand.u32 %v175, 2147483648
    %v214 = vor.u32 1.1754944e-38, %v213
    %v215 = vsel %vm212, %v214, %v210
    %v216 = vmul.f32 1.0, %v215
    %v217 = vrcp.pop %v176
    %v218 = vmul.f32 %v176, %v217
    %v219 = vsub.f32 1.0, %v218
    %v220 = vmul.f32 %v217, %v219
    %v221 = vadd.f32 %v217, %v220
    %vm222 = vweird.f32 %v176
    %vm223 = vweird.f32 %v217
    %vm224 = vmor %vm222, %vm223
    %v225 = vsel %vm224, %v217, %v221
    %v226 = vand.u32 2147483647, %v176
    %vm227 = vcmp.eq.f32.partialorder %v226, 8.507059e+37
    %v228 = vand.u32 %v176, 2147483648
    %v229 = vor.u32 1.1754944e-38, %v228
    %v230 = vsel %vm227, %v229, %v225
    %v231 = vmul.f32 1.0, %v230
    %v232 = vrcp.pop %v177
    %v233 = vmul.f32 %v177, %v232
    %v234 = vsub.f32 1.0, %v233
    %v235 = vmul.f32 %v232, %v234
    %v236 = vadd.f32 %v232, %v235
    %vm237 = vweird.f32 %v177
    %vm238 = vweird.f32 %v232
    %vm239 = vmor %vm237, %vm238
    %v240 = vsel %vm239, %v232, %v236
    %v241 = vand.u32 2147483647, %v177
    %vm242 = vcmp.eq.f32.partialorder %v241, 8.507059e+37
    %v243 = vand.u32 %v177, 2147483648
    %v244 = vor.u32 1.1754944e-38, %v243
    %v245 = vsel %vm242, %v244, %v240
    %v246 = vmul.f32 1.0, %v245
    %v247 = vrcp.pop %v178
    %v248 = vmul.f32 %v178, %v247
    %v249 = vsub.f32 1.0, %v248
    %v250 = vmul.f32 %v247, %v249
    %v251 = vadd.f32 %v247, %v250
    %vm252 = vweird.f32 %v178
    %vm253 = vweird.f32 %v247
    %vm254 = vmor %vm252, %vm253
    %v255 = vsel %vm254, %v247, %v251
    %v256 = vand.u32 2147483647, %v178
    %vm257 = vcmp.eq.f32.partialorder %v256, 8.507059e+37
    %v258 = vand.u32 %v178, 2147483648
    %v259 = vor.u32 1.1754944e-38, %v258
    %v260 = vsel %vm257, %v259, %v255
    %v261 = vmul.f32 1.0, %v260
    %v262 = vrcp.pop %v179
    %v263 = vmul.f32 %v179, %v262
    %v264 = vsub.f32 1.0, %v263
    %v265 = vmul.f32 %v262, %v264
    %v266 = vadd.f32 %v262, %v265
    %vm267 = vweird.f32 %v179
    %vm268 = vweird.f32 %v262
    %vm269 = vmor %vm267, %vm268
    %v270 = vsel %vm269, %v262, %v266
    %v271 = vand.u32 2147483647, %v179
    %vm272 = vcmp.eq.f32.partialorder %v271, 8.507059e+37
    %v273 = vand.u32 %v179, 2147483648
    %v274 = vor.u32 1.1754944e-38, %v273
    %v275 = vsel %vm272, %v274, %v270
    %v276 = vmul.f32 1.0, %v275
    %v277 = vrcp.pop %v180
    %v278 = vmul.f32 %v180, %v277
    %v279 = vsub.f32 1.0, %v278
    %v280 = vmul.f32 %v277, %v279
    %v281 = vadd.f32 %v277, %v280
    %vm282 = vweird.f32 %v180
    %vm283 = vweird.f32 %v277
    %vm284 = vmor %vm282, %vm283
    %v285 = vsel %vm284, %v277, %v281
    %v286 = vand.u32 2147483647, %v180
    %vm287 = vcmp.eq.f32.partialorder %v286, 8.507059e+37
    %v288 = vand.u32 %v180, 2147483648
    %v289 = vor.u32 1.1754944e-38, %v288
    %v290 = vsel %vm287, %v289, %v285
    %v291 = vmul.f32 1.0, %v290
    %v292 = vrcp.pop %v181
    %v293 = vmul.f32 %v181, %v292
    %v294 = vsub.f32 1.0, %v293
    %v295 = vmul.f32 %v292, %v294
    %v296 = vadd.f32 %v292, %v295
    %vm297 = vweird.f32 %v181
    %vm298 = vweird.f32 %v292
    %vm299 = vmor %vm297, %vm298
    %v300 = vsel %vm299, %v292, %v296
    %v301 = vand.u32 2147483647, %v181
    %vm302 = vcmp.eq.f32.partialorder %v301, 8.507059e+37
    %v303 = vand.u32 %v181, 2147483648
    %v304 = vor.u32 1.1754944e-38, %v303
    %v305 = vsel %vm302, %v304, %v300
    %v306 = vmul.f32 1.0, %v305
    %v307 = vrcp.pop %v182
    %v308 = vmul.f32 %v182, %v307
    %v309 = vsub.f32 1.0, %v308
    %v310 = vmul.f32 %v307, %v309
    %v311 = vadd.f32 %v307, %v310
    %vm312 = vweird.f32 %v182
    %vm313 = vweird.f32 %v307
    %vm314 = vmor %vm312, %vm313
    %v315 = vsel %vm314, %v307, %v311
    %v316 = vand.u32 2147483647, %v182
    %vm317 = vcmp.eq.f32.partialorder %v316, 8.507059e+37
    %v318 = vand.u32 %v182, 2147483648
    %v319 = vor.u32 1.1754944e-38, %v318
    %v320 = vsel %vm317, %v319, %v315
    %v321 = vmul.f32 1.0, %v320
    %v322 = vrcp.pop %v183
    %v323 = vmul.f32 %v183, %v322
    %v324 = vsub.f32 1.0, %v323
    %v325 = vmul.f32 %v322, %v324
    %v326 = vadd.f32 %v322, %v325
    %vm327 = vweird.f32 %v183
    %vm328 = vweird.f32 %v322
    %vm329 = vmor %vm327, %vm328
    %v330 = vsel %vm329, %v322, %v326
    %v331 = vand.u32 2147483647, %v183
    %vm332 = vcmp.eq.f32.partialorder %v331, 8.507059e+37
    %v333 = vand.u32 %v183, 2147483648
    %v334 = vor.u32 1.1754944e-38, %v333
    %v335 = vsel %vm332, %v334, %v330
    %v336 = vmul.f32 1.0, %v335
    %v337 = vrcp.pop %v184
    %v338 = vmul.f32 %v184, %v337
    %v339 = vsub.f32 1.0, %v338
    %v340 = vmul.f32 %v337, %v339
    %v341 = vadd.f32 %v337, %v340
    %vm342 = vweird.f32 %v184
    %vm343 = vweird.f32 %v337
    %vm344 = vmor %vm342, %vm343
    %v345 = vsel %vm344, %v337, %v341
    %v346 = vand.u32 2147483647, %v184
    %vm347 = vcmp.eq.f32.partialorder %v346, 8.507059e+37
    %v348 = vand.u32 %v184, 2147483648
    %v349 = vor.u32 1.1754944e-38, %v348
    %v350 = vsel %vm347, %v349, %v345
    %v351 = vmul.f32 1.0, %v350
    %v352 = vrcp.pop %v185
    %v353 = vmul.f32 %v185, %v352
    %v354 = vsub.f32 1.0, %v353
    %v355 = vmul.f32 %v352, %v354
    %v356 = vadd.f32 %v352, %v355
    %vm357 = vweird.f32 %v185
    %vm358 = vweird.f32 %v352
    %vm359 = vmor %vm357, %vm358
    %v360 = vsel %vm359, %v352, %v356
    %v361 = vand.u32 2147483647, %v185
    %vm362 = vcmp.eq.f32.partialorder %v361, 8.507059e+37
    %v363 = vand.u32 %v185, 2147483648
    %v364 = vor.u32 1.1754944e-38, %v363
    %v365 = vsel %vm362, %v364, %v360
    %v366 = vmul.f32 1.0, %v365
    %v367 = vrcp.pop %v186
    %v368 = vmul.f32 %v186, %v367
    %v369 = vsub.f32 1.0, %v368
    %v370 = vmul.f32 %v367, %v369
    %v371 = vadd.f32 %v367, %v370
    %vm372 = vweird.f32 %v186
    %vm373 = vweird.f32 %v367
    %vm374 = vmor %vm372, %vm373
    %v375 = vsel %vm374, %v367, %v371
    %v376 = vand.u32 2147483647, %v186
    %vm377 = vcmp.eq.f32.partialorder %v376, 8.507059e+37
    %v378 = vand.u32 %v186, 2147483648
    %v379 = vor.u32 1.1754944e-38, %v378
    %v380 = vsel %vm377, %v379, %v375
    %v381 = vmul.f32 1.0, %v380
    %v382 = vmul.f32 %v122, %v201
    %v383 = vmul.f32 %v123, %v216
    %v384 = vmul.f32 %v124, %v231
    %v385 = vmul.f32 %v125, %v246
    %v386 = vmul.f32 %v126, %v261
    %v387 = vmul.f32 %v127, %v276
    %v388 = vmul.f32 %v128, %v291
    %v389 = vmul.f32 %v129, %v306
    %v390 = vmul.f32 %v130, %v321
    %v391 = vmul.f32 %v131, %v336
    %v392 = vmul.f32 %v132, %v351
    %v393 = vmul.f32 %v133, %v366
    %v394 = vmul.f32 %v134, %v381
    %v395 = vpack.c.bf16 %v383, %v382
    %v396 = vpack.c.bf16 %v385, %v384
    %v397 = vpack.c.bf16 %v387, %v386
    %v398 = vpack.c.bf16 %v389, %v388
    %v399 = vpack.c.bf16 %v391, %v390
    %v400 = vpack.c.bf16 %v393, %v392
    %v401 = vpack.c.bf16 %v394, %v394
    %v402 = vld [vmem:[%s2] sm:$0xf]
    %v403 = vld [vmem:[%s2 + $0x4] sm:$0xf]
    %v404 = vld [vmem:[%s2 + $0x8] sm:$0xf]
    %v405 = vld [vmem:[%s2 + $0xc] sm:$0xf]
    %v406 = vld [vmem:[%s2 + $0x10] sm:$0xf]
    %v407 = vld [vmem:[%s2 + $0x14] sm:$0xf]
    %v408 = vld [vmem:[%s2 + $0x18] sm:$0xf]
    %v409 = vld [vmem:[%s2 + $0x1c] sm:$0xf]
    %v410 = vld [vmem:[%s2 + $0x20] sm:$0xf]
    %v411 = vld [vmem:[%s2 + $0x24] sm:$0xf]
    %v412 = vld [vmem:[%s2 + $0x28] sm:$0xf]
    %v413 = vld [vmem:[%s2 + $0x2c] sm:$0xf]
    %v414 = vld [vmem:[%s2 + $0x30] sm:$0xf]
    %v415 = vld [vmem:[%s2 + $0x34] sm:$0xf]
    %v416 = vld [vmem:[%s2 + $0x38] sm:$0xf]
    %v417 = vld [vmem:[%s2 + $0x3c] sm:$0xf]
    %v418 = vld [vmem:[%s3] sm:$0x1]
    %v420 = vperm.slane %v418, 0
    %v438 = vunpack.c.l.b16 %v402
    %v439 = vunpack.c.l.b16 %v403
    %v440 = vunpack.c.l.b16 %v404
    %v441 = vunpack.c.l.b16 %v405
    %v442 = vunpack.c.l.b16 %v406
    %v443 = vunpack.c.l.b16 %v407
    %v444 = vunpack.c.l.b16 %v408
    %v445 = vunpack.c.l.b16 %v409
    %v446 = vunpack.c.l.b16 %v410
    %v447 = vunpack.c.l.b16 %v411
    %v448 = vunpack.c.l.b16 %v412
    %v449 = vunpack.c.l.b16 %v413
    %v450 = vunpack.c.l.b16 %v414
    %v451 = vunpack.c.l.b16 %v415
    %v452 = vunpack.c.l.b16 %v416
    %v453 = vunpack.c.l.b16 %v417
    %v454 = vpack.c.b16 %v439, %v438
    %v455 = vpack.c.b16 %v441, %v440
    %v456 = vpack.c.b16 %v443, %v442
    %v457 = vpack.c.b16 %v445, %v444
    %v458 = vpack.c.b16 %v447, %v446
    %v459 = vpack.c.b16 %v449, %v448
    %v460 = vpack.c.b16 %v451, %v450
    %v461 = vpack.c.b16 %v453, %v452
    %470 = vmatpush.bf16.msra.mxu0 %v461
    %471 = vmatpush.bf16.msra.mxu0 %v460
    %472 = vmatpush.bf16.msra.mxu0 %v459
    %473 = vmatpush.bf16.msra.mxu0 %v458
    %474 = vmatpush.bf16.msra.mxu0 %v457
    %475 = vmatpush.bf16.msra.mxu0 %v456
    %476 = vmatpush.bf16.msra.mxu0 %v455
    %477 = vmatpush.bf16.msra.mxu0 %v454
    %478 = vmatmul.bf16.gmra.mxu0 %v395
    %v479 = vpop.f32.mrf.mxu0
    %v480 = vadd.f32 %v420, %v479
    %v481 = vpop.f32.mrf.mxu0
    %v482 = vadd.f32 %v420, %v481
    %483 = vmatmul.bf16.gmra.mxu0 %v396
    %v484 = vpop.f32.mrf.mxu0
    %v485 = vadd.f32 %v420, %v484
    %v486 = vpop.f32.mrf.mxu0
    %v487 = vadd.f32 %v420, %v486
    %488 = vmatmul.bf16.gmra.mxu0 %v397
    %v489 = vpop.f32.mrf.mxu0
    %v490 = vadd.f32 %v420, %v489
    %v491 = vpop.f32.mrf.mxu0
    %v492 = vadd.f32 %v420, %v491
    %493 = vmatmul.bf16.gmra.mxu0 %v398
    %v494 = vpop.f32.mrf.mxu0
    %v495 = vadd.f32 %v420, %v494
    %v496 = vpop.f32.mrf.mxu0
    %v497 = vadd.f32 %v420, %v496
    %498 = vmatmul.bf16.gmra.mxu0 %v399
    %v499 = vpop.f32.mrf.mxu0
    %v500 = vadd.f32 %v420, %v499
    %v501 = vpop.f32.mrf.mxu0
    %v502 = vadd.f32 %v420, %v501
    %503 = vmatmul.bf16.gmra.mxu0 %v400
    %v504 = vpop.f32.mrf.mxu0
    %v505 = vadd.f32 %v420, %v504
    %v506 = vpop.f32.mrf.mxu0
    %v507 = vadd.f32 %v420, %v506
    %508 = vmatmul.bf16.gmra.mxu0 %v401
    %v509 = vpop.f32.mrf.mxu0
    %v510 = vadd.f32 %v420, %v509
    %v511 = vpop.f32.mrf.mxu0
    %512 = vdwg.mxu0
    %v513 = vxor.u32 %v480, 2147483648
    %v514 = vxor.u32 %v482, 2147483648
    %v515 = vxor.u32 %v485, 2147483648
    %v516 = vxor.u32 %v487, 2147483648
    %v517 = vxor.u32 %v490, 2147483648
    %v518 = vxor.u32 %v492, 2147483648
    %v519 = vxor.u32 %v495, 2147483648
    %v520 = vxor.u32 %v497, 2147483648
    %v521 = vxor.u32 %v500, 2147483648
    %v522 = vxor.u32 %v502, 2147483648
    %v523 = vxor.u32 %v505, 2147483648
    %v524 = vxor.u32 %v507, 2147483648
    %v525 = vxor.u32 %v510, 2147483648
    %v526 = vmul.f32 %v513, 1.442695
    %v527 = vpow.pop %v526
    %v528 = vmul.f32 %v514, 1.442695
    %v529 = vpow.pop %v528
    %v530 = vmul.f32 %v515, 1.442695
    %v531 = vpow.pop %v530
    %v532 = vmul.f32 %v516, 1.442695
    %v533 = vpow.pop %v532
    %v534 = vmul.f32 %v517, 1.442695
    %v535 = vpow.pop %v534
    %v536 = vmul.f32 %v518, 1.442695
    %v537 = vpow.pop %v536
    %v538 = vmul.f32 %v519, 1.442695
    %v539 = vpow.pop %v538
    %v540 = vmul.f32 %v520, 1.442695
    %v541 = vpow.pop %v540
    %v542 = vmul.f32 %v521, 1.442695
    %v543 = vpow.pop %v542
    %v544 = vmul.f32 %v522, 1.442695
    %v545 = vpow.pop %v544
    %v546 = vmul.f32 %v523, 1.442695
    %v547 = vpow.pop %v546
    %v548 = vmul.f32 %v524, 1.442695
    %v549 = vpow.pop %v548
    %v550 = vmul.f32 %v525, 1.442695
    %v551 = vpow.pop %v550
    %v552 = vadd.f32 %v527, 1.0
    %v553 = vadd.f32 %v529, 1.0
    %v554 = vadd.f32 %v531, 1.0
    %v555 = vadd.f32 %v533, 1.0
    %v556 = vadd.f32 %v535, 1.0
    %v557 = vadd.f32 %v537, 1.0
    %v558 = vadd.f32 %v539, 1.0
    %v559 = vadd.f32 %v541, 1.0
    %v560 = vadd.f32 %v543, 1.0
    %v561 = vadd.f32 %v545, 1.0
    %v562 = vadd.f32 %v547, 1.0
    %v563 = vadd.f32 %v549, 1.0
    %v564 = vadd.f32 %v551, 1.0
    %v565 = vrcp.pop %v552
    %v566 = vmul.f32 %v552, %v565
    %v567 = vsub.f32 1.0, %v566
    %v568 = vmul.f32 %v565, %v567
    %v569 = vadd.f32 %v565, %v568
    %vm570 = vweird.f32 %v552
    %vm571 = vweird.f32 %v565
    %vm572 = vmor %vm570, %vm571
    %v573 = vsel %vm572, %v565, %v569
    %v574 = vand.u32 2147483647, %v552
    %vm575 = vcmp.eq.f32.partialorder %v574, 8.507059e+37
    %v576 = vand.u32 %v552, 2147483648
    %v577 = vor.u32 1.1754944e-38, %v576
    %v578 = vsel %vm575, %v577, %v573
    %v579 = vmul.f32 1.0, %v578
    %v580 = vrcp.pop %v553
    %v581 = vmul.f32 %v553, %v580
    %v582 = vsub.f32 1.0, %v581
    %v583 = vmul.f32 %v580, %v582
    %v584 = vadd.f32 %v580, %v583
    %vm585 = vweird.f32 %v553
    %vm586 = vweird.f32 %v580
    %vm587 = vmor %vm585, %vm586
    %v588 = vsel %vm587, %v580, %v584
    %v589 = vand.u32 2147483647, %v553
    %vm590 = vcmp.eq.f32.partialorder %v589, 8.507059e+37
    %v591 = vand.u32 %v553, 2147483648
    %v592 = vor.u32 1.1754944e-38, %v591
    %v593 = vsel %vm590, %v592, %v588
    %v594 = vmul.f32 1.0, %v593
    %v595 = vrcp.pop %v554
    %v596 = vmul.f32 %v554, %v595
    %v597 = vsub.f32 1.0, %v596
    %v598 = vmul.f32 %v595, %v597
    %v599 = vadd.f32 %v595, %v598
    %vm600 = vweird.f32 %v554
    %vm601 = vweird.f32 %v595
    %vm602 = vmor %vm600, %vm601
    %v603 = vsel %vm602, %v595, %v599
    %v604 = vand.u32 2147483647, %v554
    %vm605 = vcmp.eq.f32.partialorder %v604, 8.507059e+37
    %v606 = vand.u32 %v554, 2147483648
    %v607 = vor.u32 1.1754944e-38, %v606
    %v608 = vsel %vm605, %v607, %v603
    %v609 = vmul.f32 1.0, %v608
    %v610 = vrcp.pop %v555
    %v611 = vmul.f32 %v555, %v610
    %v612 = vsub.f32 1.0, %v611
    %v613 = vmul.f32 %v610, %v612
    %v614 = vadd.f32 %v610, %v613
    %vm615 = vweird.f32 %v555
    %vm616 = vweird.f32 %v610
    %vm617 = vmor %vm615, %vm616
    %v618 = vsel %vm617, %v610, %v614
    %v619 = vand.u32 2147483647, %v555
    %vm620 = vcmp.eq.f32.partialorder %v619, 8.507059e+37
    %v621 = vand.u32 %v555, 2147483648
    %v622 = vor.u32 1.1754944e-38, %v621
    %v623 = vsel %vm620, %v622, %v618
    %v624 = vmul.f32 1.0, %v623
    %v625 = vrcp.pop %v556
    %v626 = vmul.f32 %v556, %v625
    %v627 = vsub.f32 1.0, %v626
    %v628 = vmul.f32 %v625, %v627
    %v629 = vadd.f32 %v625, %v628
    %vm630 = vweird.f32 %v556
    %vm631 = vweird.f32 %v625
    %vm632 = vmor %vm630, %vm631
    %v633 = vsel %vm632, %v625, %v629
    %v634 = vand.u32 2147483647, %v556
    %vm635 = vcmp.eq.f32.partialorder %v634, 8.507059e+37
    %v636 = vand.u32 %v556, 2147483648
    %v637 = vor.u32 1.1754944e-38, %v636
    %v638 = vsel %vm635, %v637, %v633
    %v639 = vmul.f32 1.0, %v638
    %v640 = vrcp.pop %v557
    %v641 = vmul.f32 %v557, %v640
    %v642 = vsub.f32 1.0, %v641
    %v643 = vmul.f32 %v640, %v642
    %v644 = vadd.f32 %v640, %v643
    %vm645 = vweird.f32 %v557
    %vm646 = vweird.f32 %v640
    %vm647 = vmor %vm645, %vm646
    %v648 = vsel %vm647, %v640, %v644
    %v649 = vand.u32 2147483647, %v557
    %vm650 = vcmp.eq.f32.partialorder %v649, 8.507059e+37
    %v651 = vand.u32 %v557, 2147483648
    %v652 = vor.u32 1.1754944e-38, %v651
    %v653 = vsel %vm650, %v652, %v648
    %v654 = vmul.f32 1.0, %v653
    %v655 = vrcp.pop %v558
    %v656 = vmul.f32 %v558, %v655
    %v657 = vsub.f32 1.0, %v656
    %v658 = vmul.f32 %v655, %v657
    %v659 = vadd.f32 %v655, %v658
    %vm660 = vweird.f32 %v558
    %vm661 = vweird.f32 %v655
    %vm662 = vmor %vm660, %vm661
    %v663 = vsel %vm662, %v655, %v659
    %v664 = vand.u32 2147483647, %v558
    %vm665 = vcmp.eq.f32.partialorder %v664, 8.507059e+37
    %v666 = vand.u32 %v558, 2147483648
    %v667 = vor.u32 1.1754944e-38, %v666
    %v668 = vsel %vm665, %v667, %v663
    %v669 = vmul.f32 1.0, %v668
    %v670 = vrcp.pop %v559
    %v671 = vmul.f32 %v559, %v670
    %v672 = vsub.f32 1.0, %v671
    %v673 = vmul.f32 %v670, %v672
    %v674 = vadd.f32 %v670, %v673
    %vm675 = vweird.f32 %v559
    %vm676 = vweird.f32 %v670
    %vm677 = vmor %vm675, %vm676
    %v678 = vsel %vm677, %v670, %v674
    %v679 = vand.u32 2147483647, %v559
    %vm680 = vcmp.eq.f32.partialorder %v679, 8.507059e+37
    %v681 = vand.u32 %v559, 2147483648
    %v682 = vor.u32 1.1754944e-38, %v681
    %v683 = vsel %vm680, %v682, %v678
    %v684 = vmul.f32 1.0, %v683
    %v685 = vrcp.pop %v560
    %v686 = vmul.f32 %v560, %v685
    %v687 = vsub.f32 1.0, %v686
    %v688 = vmul.f32 %v685, %v687
    %v689 = vadd.f32 %v685, %v688
    %vm690 = vweird.f32 %v560
    %vm691 = vweird.f32 %v685
    %vm692 = vmor %vm690, %vm691
    %v693 = vsel %vm692, %v685, %v689
    %v694 = vand.u32 2147483647, %v560
    %vm695 = vcmp.eq.f32.partialorder %v694, 8.507059e+37
    %v696 = vand.u32 %v560, 2147483648
    %v697 = vor.u32 1.1754944e-38, %v696
    %v698 = vsel %vm695, %v697, %v693
    %v699 = vmul.f32 1.0, %v698
    %v700 = vrcp.pop %v561
    %v701 = vmul.f32 %v561, %v700
    %v702 = vsub.f32 1.0, %v701
    %v703 = vmul.f32 %v700, %v702
    %v704 = vadd.f32 %v700, %v703
    %vm705 = vweird.f32 %v561
    %vm706 = vweird.f32 %v700
    %vm707 = vmor %vm705, %vm706
    %v708 = vsel %vm707, %v700, %v704
    %v709 = vand.u32 2147483647, %v561
    %vm710 = vcmp.eq.f32.partialorder %v709, 8.507059e+37
    %v711 = vand.u32 %v561, 2147483648
    %v712 = vor.u32 1.1754944e-38, %v711
    %v713 = vsel %vm710, %v712, %v708
    %v714 = vmul.f32 1.0, %v713
    %v715 = vrcp.pop %v562
    %v716 = vmul.f32 %v562, %v715
    %v717 = vsub.f32 1.0, %v716
    %v718 = vmul.f32 %v715, %v717
    %v719 = vadd.f32 %v715, %v718
    %vm720 = vweird.f32 %v562
    %vm721 = vweird.f32 %v715
    %vm722 = vmor %vm720, %vm721
    %v723 = vsel %vm722, %v715, %v719
    %v724 = vand.u32 2147483647, %v562
    %vm725 = vcmp.eq.f32.partialorder %v724, 8.507059e+37
    %v726 = vand.u32 %v562, 2147483648
    %v727 = vor.u32 1.1754944e-38, %v726
    %v728 = vsel %vm725, %v727, %v723
    %v729 = vmul.f32 1.0, %v728
    %v730 = vrcp.pop %v563
    %v731 = vmul.f32 %v563, %v730
    %v732 = vsub.f32 1.0, %v731
    %v733 = vmul.f32 %v730, %v732
    %v734 = vadd.f32 %v730, %v733
    %vm735 = vweird.f32 %v563
    %vm736 = vweird.f32 %v730
    %vm737 = vmor %vm735, %vm736
    %v738 = vsel %vm737, %v730, %v734
    %v739 = vand.u32 2147483647, %v563
    %vm740 = vcmp.eq.f32.partialorder %v739, 8.507059e+37
    %v741 = vand.u32 %v563, 2147483648
    %v742 = vor.u32 1.1754944e-38, %v741
    %v743 = vsel %vm740, %v742, %v738
    %v744 = vmul.f32 1.0, %v743
    %v745 = vrcp.pop %v564
    %v746 = vmul.f32 %v564, %v745
    %v747 = vsub.f32 1.0, %v746
    %v748 = vmul.f32 %v745, %v747
    %v749 = vadd.f32 %v745, %v748
    %vm750 = vweird.f32 %v564
    %vm751 = vweird.f32 %v745
    %vm752 = vmor %vm750, %vm751
    %v753 = vsel %vm752, %v745, %v749
    %v754 = vand.u32 2147483647, %v564
    %vm755 = vcmp.eq.f32.partialorder %v754, 8.507059e+37
    %v756 = vand.u32 %v564, 2147483648
    %v757 = vor.u32 1.1754944e-38, %v756
    %v758 = vsel %vm755, %v757, %v753
    %v759 = vmul.f32 1.0, %v758
    %v760 = vmul.f32 %v480, %v579
    %v761 = vmul.f32 %v482, %v594
    %v762 = vmul.f32 %v485, %v609
    %v763 = vmul.f32 %v487, %v624
    %v764 = vmul.f32 %v490, %v639
    %v765 = vmul.f32 %v492, %v654
    %v766 = vmul.f32 %v495, %v669
    %v767 = vmul.f32 %v497, %v684
    %v768 = vmul.f32 %v500, %v699
    %v769 = vmul.f32 %v502, %v714
    %v770 = vmul.f32 %v505, %v729
    %v771 = vmul.f32 %v507, %v744
    %v772 = vmul.f32 %v510, %v759
    %v773 = vpack.c.bf16 %v761, %v760
    %v774 = vpack.c.bf16 %v763, %v762
    %v775 = vpack.c.bf16 %v765, %v764
    %v776 = vpack.c.bf16 %v767, %v766
    %v777 = vpack.c.bf16 %v769, %v768
    %v778 = vpack.c.bf16 %v771, %v770
    %v779 = vpack.c.bf16 %v772, %v772
    %v780 = vld [vmem:[#allocation2] sm:$0xf]
    %v781 = vld [vmem:[#allocation2 + $0x4] sm:$0xf]
    %v782 = vld [vmem:[#allocation2 + $0x8] sm:$0xf]
    %v783 = vld [vmem:[#allocation2 + $0xc] sm:$0xf]
    %v784 = vld [vmem:[#allocation2 + $0x10] sm:$0xf]
    %v785 = vld [vmem:[#allocation2 + $0x14] sm:$0xf]
    %v786 = vld [vmem:[#allocation2 + $0x18] sm:$0xf]
    %v787 = vld [vmem:[#allocation2 + $0x1c] sm:$0xf]
    %v788 = vld [vmem:[#allocation2 + $0x20] sm:$0xf]
    %v789 = vld [vmem:[#allocation2 + $0x24] sm:$0xf]
    %v790 = vld [vmem:[#allocation2 + $0x28] sm:$0xf]
    %v791 = vld [vmem:[#allocation2 + $0x2c] sm:$0xf]
    %v792 = vld [vmem:[#allocation2 + $0x30] sm:$0xf]
    %v793 = vld [vmem:[#allocation2 + $0x34] sm:$0xf]
    %v794 = vld [vmem:[#allocation2 + $0x38] sm:$0xf]
    %v795 = vld [vmem:[#allocation2 + $0x3c] sm:$0xf]
    %v796 = vld [vmem:[%s5] sm:$0x1]
    %v798 = vperm.slane %v796, 0
    %v816 = vunpack.c.l.b16 %v780
    %v817 = vunpack.c.l.b16 %v781
    %v818 = vunpack.c.l.b16 %v782
    %v819 = vunpack.c.l.b16 %v783
    %v820 = vunpack.c.l.b16 %v784
    %v821 = vunpack.c.l.b16 %v785
    %v822 = vunpack.c.l.b16 %v786
    %v823 = vunpack.c.l.b16 %v787
    %v824 = vunpack.c.l.b16 %v788
    %v825 = vunpack.c.l.b16 %v789
    %v826 = vunpack.c.l.b16 %v790
    %v827 = vunpack.c.l.b16 %v791
    %v828 = vunpack.c.l.b16 %v792
    %v829 = vunpack.c.l.b16 %v793
    %v830 = vunpack.c.l.b16 %v794
    %v831 = vunpack.c.l.b16 %v795
    %v832 = vpack.c.b16 %v817, %v816
    %v833 = vpack.c.b16 %v819, %v818
    %v834 = vpack.c.b16 %v821, %v820
    %v835 = vpack.c.b16 %v823, %v822
    %v836 = vpack.c.b16 %v825, %v824
    %v837 = vpack.c.b16 %v827, %v826
    %v838 = vpack.c.b16 %v829, %v828
    %v839 = vpack.c.b16 %v831, %v830
    %848 = vmatpush.bf16.msra.mxu0 %v839
    %849 = vmatpush.bf16.msra.mxu0 %v838
    %850 = vmatpush.bf16.msra.mxu0 %v837
    %851 = vmatpush.bf16.msra.mxu0 %v836
    %852 = vmatpush.bf16.msra.mxu0 %v835
    %853 = vmatpush.bf16.msra.mxu0 %v834
    %854 = vmatpush.bf16.msra.mxu0 %v833
    %855 = vmatpush.bf16.msra.mxu0 %v832
    %856 = vmatmul.bf16.gmra.mxu0 %v773
    %v857 = vpop.f32.mrf.mxu0
    %v858 = vadd.f32 %v798, %v857
    %v859 = vpop.f32.mrf.mxu0
    %v860 = vadd.f32 %v798, %v859
    %861 = vmatmul.bf16.gmra.mxu0 %v774
    %v862 = vpop.f32.mrf.mxu0
    %v863 = vadd.f32 %v798, %v862
    %v864 = vpop.f32.mrf.mxu0
    %v865 = vadd.f32 %v798, %v864
    %866 = vmatmul.bf16.gmra.mxu0 %v775
    %v867 = vpop.f32.mrf.mxu0
    %v868 = vadd.f32 %v798, %v867
    %v869 = vpop.f32.mrf.mxu0
    %v870 = vadd.f32 %v798, %v869
    %871 = vmatmul.bf16.gmra.mxu0 %v776
    %v872 = vpop.f32.mrf.mxu0
    %v873 = vadd.f32 %v798, %v872
    %v874 = vpop.f32.mrf.mxu0
    %v875 = vadd.f32 %v798, %v874
    %876 = vmatmul.bf16.gmra.mxu0 %v777
    %v877 = vpop.f32.mrf.mxu0
    %v878 = vadd.f32 %v798, %v877
    %v879 = vpop.f32.mrf.mxu0
    %v880 = vadd.f32 %v798, %v879
    %881 = vmatmul.bf16.gmra.mxu0 %v778
    %v882 = vpop.f32.mrf.mxu0
    %v883 = vadd.f32 %v798, %v882
    %v884 = vpop.f32.mrf.mxu0
    %v885 = vadd.f32 %v798, %v884
    %886 = vmatmul.bf16.gmra.mxu0 %v779
    %v887 = vpop.f32.mrf.mxu0
    %v888 = vadd.f32 %v798, %v887
    %v889 = vpop.f32.mrf.mxu0
    %890 = vdwg.mxu0
    %v891 = vadd.f32 %v122, %v858
    %v892 = vadd.f32 %v123, %v860
    %v893 = vadd.f32 %v124, %v863
    %v894 = vadd.f32 %v125, %v865
    %v895 = vadd.f32 %v126, %v868
    %v896 = vadd.f32 %v127, %v870
    %v897 = vadd.f32 %v128, %v873
    %v898 = vadd.f32 %v129, %v875
    %v899 = vadd.f32 %v130, %v878
    %v900 = vadd.f32 %v131, %v880
    %v901 = vadd.f32 %v132, %v883
    %v902 = vadd.f32 %v133, %v885
    %v903 = vadd.f32 %v134, %v888
    %904 = vst [vmem:[#allocation5] sm:$0xff] %v891
    %905 = vst [vmem:[#allocation5 + $0x8] sm:$0xff] %v892
    %906 = vst [vmem:[#allocation5 + $0x10] sm:$0xff] %v893
    %907 = vst [vmem:[#allocation5 + $0x18] sm:$0xff] %v894
    %908 = vst [vmem:[#allocation5 + $0x20] sm:$0xff] %v895
    %909 = vst [vmem:[#allocation5 + $0x28] sm:$0xff] %v896
    %910 = vst [vmem:[#allocation5 + $0x30] sm:$0xff] %v897
    %911 = vst [vmem:[#allocation5 + $0x38] sm:$0xff] %v898
    %912 = vst [vmem:[#allocation5 + $0x40] sm:$0xff] %v899
    %913 = vst [vmem:[#allocation5 + $0x48] sm:$0xff] %v900
    %914 = vst [vmem:[#allocation5 + $0x50] sm:$0xff] %v901
    %915 = vst [vmem:[#allocation5 + $0x58] sm:$0xff] %v902
    %916 = vst [vmem:[#allocation5 + $0x60] sm:$0xff] %v903
    // Predicated region
    $region30: #{tpu_custom_call.1} parent=1 // pred_check
      _
    $region31: #{tpu_custom_call.1} parent=1 // pred_check_branch
      %918 = sbr.rel (0) target = $region33
    $region32: #{tpu_custom_call.1} parent=1 // pred_region
      %920 = vsyncadd [#allocation4], 0
      %s921 = sshll.u32 [#allocation5], 4
      %s922 = int_to_ptr.vmem [resolvable:$true] %s921
      %s923 = sshll.u32 %s6, 4
      %s924 = int_to_ptr.hbm [resolvable:$true] %s923
      %929 = dma.vmem_to_hbm [thread:$0]  %s922, 1664, %s924, [#allocation4], 128, 128, 8
    $region33: #{tpu_custom_call.1} parent=1 // pred_fallthru
      _
    // Predicated region
    $region34: #{tpu_custom_call.1} parent=1 // pred_check
      _
    $region35: #{tpu_custom_call.1} parent=1 // pred_check_branch
      %931 = sbr.rel (0) target = $region37
    $region36: #{tpu_custom_call.1} parent=1 // pred_region
      %933 = dma.done [#allocation4], 1664
    $region37: #{tpu_custom_call.1} parent=1 // pred_fallthru
      _
    %934 = vsyncpa [#allocation3], 1
    %935 = vsyncpa [#allocation4], 1

</llo_original>
